<compile_context>
chip_gen: v7x
topology: tpu7x:2x2x1
jax: 0.10.0
libtpu: 0.0.40
codegen_flags: <defaults>
</compile_context>

<pallas_src>
import functools
import math

import jax
import jax.numpy as jnp
from jax.experimental import pallas as pl
from jax.experimental.pallas import tpu as pltpu


# ----------------------------- Pallas kernel --------------------------------
def _aff_fused_kernel(x_ref, r_ref,
                      w1l_ref, b1l_ref, w2l_ref, b2l_ref,
                      w1g_ref, b1g_ref, w2g_ref, b2g_ref,
                      o_ref, *, inv_m):
    """Fused AFF for one batch element, packed layout.

    x_ref, r_ref, o_ref : (Mp, PC)   whole per-batch spatial slab, P pixels/row
    w1l_ref             : (PC, PCi)  block-diag folded local conv1+BN1 weight
    b1l_ref             : (1, PCi)
    w2l_ref             : (PCi, PC)  block-diag folded local conv2+BN2 weight
    b2l_ref             : (1, PC)
    w1g_ref             : (PC, Ci)   row-tiled folded global conv1+BN1 weight
    b1g_ref             : (1, Ci)
    w2g_ref             : (Ci, PC)   col-tiled folded global conv2+BN2 weight
    b2g_ref             : (1, PC)
    inv_m               : python float, 1 / (H*W)
    """
    x = x_ref[...].astype(jnp.float32)
    r = r_ref[...].astype(jnp.float32)
    xa = x + r

    # ---- global branch: spatial mean (f32) + tiny MLP --------------------
    # Row-tiled w1g folds the P packed pixel groups: (sum/M) @ w1g_t == mean @ w1g.
    g = jnp.sum(xa, axis=0, keepdims=True) * inv_m                      # (1, PC)
    hg = jnp.dot(g, w1g_ref[...], preferred_element_type=jnp.float32) + b1g_ref[...]
    hg = jnp.maximum(hg, 0.0)
    xg = jnp.dot(hg, w2g_ref[...], preferred_element_type=jnp.float32) + b2g_ref[...]  # (1, PC)

    # ---- local branch: 1x1 conv (+BN folded) -> ReLU -> 1x1 conv (+BN) ----
    h = jnp.dot(xa, w1l_ref[...], preferred_element_type=jnp.float32) + b1l_ref[...]
    h = jnp.maximum(h, 0.0)
    xl = jnp.dot(h, w2l_ref[...], preferred_element_type=jnp.float32) + b2l_ref[...]

    wei = jax.nn.sigmoid(xl + xg)
    o_ref[...] = (2.0 * x * wei + 2.0 * r * (1.0 - wei)).astype(o_ref.dtype)


# ------------------------------ host helpers ---------------------------------
def _fold_bn(w, b, gamma, beta, mean, var, eps=1e-5):
    """Fold BatchNorm (eval mode) into a preceding 1x1 conv.

    w: [Cout, Cin], b: [Cout]  ->  returns W^T folded ([Cin, Cout]) and bias [Cout].
    """
    s = gamma / jnp.sqrt(var + eps)
    w_f = (w * s[:, None]).T
    b_f = (b - mean) * s + beta
    return w_f.astype(jnp.float32), b_f.astype(jnp.float32)


def _block_diag(w, p):
    """Expand [Cin, Cout] -> block-diagonal [p*Cin, p*Cout]."""
    if p == 1:
        return w
    cin, cout = w.shape
    out = jnp.zeros((p, cin, p, cout), w.dtype)
    idx = jnp.arange(p)
    out = out.at[idx, :, idx, :].set(w)
    return out.reshape(p * cin, p * cout)


def aff_forward(x_nhwc, res_nhwc, p, *, io_dtype=None):
    """AFF forward. x_nhwc, res_nhwc: [B, H, W, C].

    io_dtype: dtype used for the big HBM streams (x, residual, out). Compute is
    always f32 inside the kernel. Default: keep the input dtype.
    """
    B, H, W, C = x_nhwc.shape
    M = H * W
    out_dtype = jnp.dtype(io_dtype) if io_dtype is not None else x_nhwc.dtype

    # Lane packing: P pixels per row so the last dim is a multiple of 128.
    P = 128 // math.gcd(C, 128)
    if M % P != 0:
        P = 1                      # graceful fallback (masked stores only)
    PC = P * C
    Mp = M // P

    # Fold BN into the 1x1 convs (local and global branches).
    w1l, b1l = _fold_bn(p["l_w1"], p["l_b1"], p["l_bn1_g"], p["l_bn1_b"],
                        p["l_bn1_m"], p["l_bn1_v"])
    w2l, b2l = _fold_bn(p["l_w2"], p["l_b2"], p["l_bn2_g"], p["l_bn2_b"],
                        p["l_bn2_m"], p["l_bn2_v"])
    w1g, b1g = _fold_bn(p["g_w1"], p["g_b1"], p["g_bn1_g"], p["g_bn1_b"],
                        p["g_bn1_m"], p["g_bn1_v"])
    w2g, b2g = _fold_bn(p["g_w2"], p["g_b2"], p["g_bn2_g"], p["g_bn2_b"],
                        p["g_bn2_m"], p["g_bn2_v"])
    Ci = w1l.shape[1]
    PCi = P * Ci

    # Pack weights for the lane-dense layout (tiny arrays, done once).
    w1l_p = _block_diag(w1l, P)                 # (PC, PCi)
    w2l_p = _block_diag(w2l, P)                 # (PCi, PC)
    b1l_p = jnp.tile(b1l, P).reshape(1, PCi)
    b2l_p = jnp.tile(b2l, P).reshape(1, PC)
    w1g_t = jnp.tile(w1g, (P, 1))               # (PC, Ci) — folds packed groups
    b1g_t = b1g.reshape(1, Ci)
    w2g_t = jnp.tile(w2g, (1, P))               # (Ci, PC) — broadcasts xg to groups
    b2g_t = jnp.tile(b2g, P).reshape(1, PC)

    # Packed, (optionally) bf16 HBM streams.
    xf = x_nhwc.reshape(B, Mp, PC).astype(out_dtype)
    rf = res_nhwc.reshape(B, Mp, PC).astype(out_dtype)

    # VMEM budget: double-buffered I/O slabs + f32 intermediates + weights.
    io_bytes = Mp * PC * jnp.dtype(out_dtype).itemsize
    f32_bytes = Mp * PC * 4
    w_bytes = 4 * (PC * PCi * 2 + PC * Ci * 2 + 4 * PC)
    vmem_needed = 6 * io_bytes + 6 * f32_bytes + 2 * w_bytes
    if vmem_needed > 48 * 2 ** 20:
        # TODO(synk): add a spatially-chunked two-pass fallback for per-batch
        # slabs that do not fit VMEM; every AFF call site in S fits easily.
        raise ValueError("per-batch AFF slab too large for the fused kernel")
    vmem_limit = int(min(64 * 2 ** 20, max(16 * 2 ** 20, int(vmem_needed * 1.25))))

    kernel = functools.partial(_aff_fused_kernel, inv_m=1.0 / float(M))

    out = pl.pallas_call(
        kernel,
        out_shape=jax.ShapeDtypeStruct((B, Mp, PC), out_dtype),
        grid_spec=pltpu.PrefetchScalarGridSpec(
            num_scalar_prefetch=0,
            grid=(B,),
            in_specs=[
                pl.BlockSpec((None, Mp, PC), lambda b: (b, 0, 0)),   # x (full slab)
                pl.BlockSpec((None, Mp, PC), lambda b: (b, 0, 0)),   # residual
                pl.BlockSpec((PC, PCi), lambda b: (0, 0)),           # w1 local (packed)
                pl.BlockSpec((1, PCi), lambda b: (0, 0)),            # b1 local
                pl.BlockSpec((PCi, PC), lambda b: (0, 0)),           # w2 local (packed)
                pl.BlockSpec((1, PC), lambda b: (0, 0)),             # b2 local
                pl.BlockSpec((PC, Ci), lambda b: (0, 0)),            # w1 global (tiled)
                pl.BlockSpec((1, Ci), lambda b: (0, 0)),             # b1 global
                pl.BlockSpec((Ci, PC), lambda b: (0, 0)),            # w2 global (tiled)
                pl.BlockSpec((1, PC), lambda b: (0, 0)),             # b2 global
            ],
            out_specs=pl.BlockSpec((None, Mp, PC), lambda b: (b, 0, 0)),
        ),
        compiler_params=pltpu.CompilerParams(
            dimension_semantics=("parallel",),
            vmem_limit_bytes=vmem_limit),
    )(xf, rf, w1l_p, b1l_p, w2l_p, b2l_p, w1g_t, b1g_t, w2g_t, b2g_t)
    return out.reshape(B, H, W, C)


# ------------------------------- reference -----------------------------------
def aff_reference(x_nhwc, res_nhwc, p):
    """Pure-JAX reference (same math, no Pallas) for validation."""
    B, H, W, C = x_nhwc.shape
    xf = x_nhwc.reshape(B, H * W, C).astype(jnp.float32)
    rf = res_nhwc.reshape(B, H * W, C).astype(jnp.float32)
    xa = xf + rf

    w1l, b1l = _fold_bn(p["l_w1"], p["l_b1"], p["l_bn1_g"], p["l_bn1_b"],
                        p["l_bn1_m"], p["l_bn1_v"])
    w2l, b2l = _fold_bn(p["l_w2"], p["l_b2"], p["l_bn2_g"], p["l_bn2_b"],
                        p["l_bn2_m"], p["l_bn2_v"])
    w1g, b1g = _fold_bn(p["g_w1"], p["g_b1"], p["g_bn1_g"], p["g_bn1_b"],
                        p["g_bn1_m"], p["g_bn1_v"])
    w2g, b2g = _fold_bn(p["g_w2"], p["g_b2"], p["g_bn2_g"], p["g_bn2_b"],
                        p["g_bn2_m"], p["g_bn2_v"])

    xl = jnp.maximum(xa @ w1l + b1l, 0.0) @ w2l + b2l
    xa_pool = jnp.mean(xa, axis=1)
    xg = (jnp.maximum(xa_pool @ w1g + b1g, 0.0) @ w2g + b2g)[:, None, :]
    wei = jax.nn.sigmoid(xl + xg)
    out = 2.0 * xf * wei + 2.0 * rf * (1.0 - wei)
    return out.reshape(B, H, W, C)


def init_aff_params(key, channels=64, r=4):
    """Deterministic parameter init matching AFF(channels, r) shapes."""
    inter = channels // r
    ks = jax.random.split(key, 8)

    def conv_w(k, cout, cin):
        return jax.random.normal(k, (cout, cin), jnp.float32) * 0.05

    def bn(k, c):
        k1, k2, k3, k4 = jax.random.split(k, 4)
        return dict(
            g=1.0 + 0.1 * jax.random.normal(k1, (c,), jnp.float32),
            b=0.1 * jax.random.normal(k2, (c,), jnp.float32),
            m=0.05 * jax.random.normal(k3, (c,), jnp.float32),
            v=1.0 + 0.1 * jax.random.uniform(k4, (c,), jnp.float32),
        )

    bn_l1, bn_l2, bn_g1, bn_g2 = bn(ks[4], inter), bn(ks[5], channels), \
                                 bn(ks[6], inter), bn(ks[7], channels)
    return {
        "l_w1": conv_w(ks[0], inter, channels), "l_b1": jnp.zeros((inter,), jnp.float32),
        "l_bn1_g": bn_l1["g"], "l_bn1_b": bn_l1["b"], "l_bn1_m": bn_l1["m"], "l_bn1_v": bn_l1["v"],
        "l_w2": conv_w(ks[1], channels, inter), "l_b2": jnp.zeros((channels,), jnp.float32),
        "l_bn2_g": bn_l2["g"], "l_bn2_b": bn_l2["b"], "l_bn2_m": bn_l2["m"], "l_bn2_v": bn_l2["v"],
        "g_w1": conv_w(ks[2], inter, channels), "g_b1": jnp.zeros((inter,), jnp.float32),
        "g_bn1_g": bn_g1["g"], "g_bn1_b": bn_g1["b"], "g_bn1_m": bn_g1["m"], "g_bn1_v": bn_g1["v"],
        "g_w2": conv_w(ks[3], channels, inter), "g_b2": jnp.zeros((channels,), jnp.float32),
        "g_bn2_g": bn_g2["g"], "g_bn2_b": bn_g2["b"], "g_bn2_m": bn_g2["m"], "g_bn2_v": bn_g2["v"],
    }


if __name__ == "__main__":
    key = jax.random.PRNGKey(0)
    k_x, k_r, k_p = jax.random.split(key, 3)

    B, C, H, W = 2, 64, 16, 16            # AFF default channels=64, r=4
    # PyTorch-style NCHW inputs.
    x_nchw = jax.random.normal(k_x, (B, C, H, W), jnp.float32)
    res_nchw = jax.random.normal(k_r, (B, C, H, W), jnp.float32)

    # NCHW -> NHWC for the TPU kernel (channels on the lane axis).
    x = jnp.transpose(x_nchw, (0, 2, 3, 1))
    residual = jnp.transpose(res_nchw, (0, 2, 3, 1))

    params = init_aff_params(k_p, channels=C, r=4)
    ref = aff_reference(x, residual, params)

    # f32 HBM streams: matches the PyTorch eval-mode forward numerics.
    out = jax.block_until_ready(aff_forward(x, residual, params))
    assert out.shape == (B, H, W, C)
    assert jnp.allclose(out, ref, atol=1e-4, rtol=1e-4), "Pallas AFF mismatch vs reference"

    # Bandwidth-optimized bf16 HBM streams (f32 compute inside the kernel).
    out_bf16 = jax.block_until_ready(
        aff_forward(x, residual, params, io_dtype=jnp.bfloat16))
    assert out_bf16.dtype == jnp.bfloat16
    assert jnp.allclose(out_bf16.astype(jnp.float32), ref, atol=1e-1, rtol=1e-1), \
        "Pallas AFF (bf16 I/O) mismatch vs reference"

    print("KERNEL_OK")
</pallas_src>

<mosaic_0001>
module attributes {stable_mosaic.version = 11 : i64} {
  func.func @_aff_fused_kernel(%arg0: i32, %arg1: memref<1x128x128xf32, #tpu.memory_space<vmem>>, %arg2: memref<1x128x128xf32, #tpu.memory_space<vmem>>, %arg3: memref<128x32xf32, #tpu.memory_space<vmem>>, %arg4: memref<1x32xf32, #tpu.memory_space<vmem>>, %arg5: memref<32x128xf32, #tpu.memory_space<vmem>>, %arg6: memref<1x128xf32, #tpu.memory_space<vmem>>, %arg7: memref<128x16xf32, #tpu.memory_space<vmem>>, %arg8: memref<1x16xf32, #tpu.memory_space<vmem>>, %arg9: memref<16x128xf32, #tpu.memory_space<vmem>>, %arg10: memref<1x128xf32, #tpu.memory_space<vmem>>, %arg11: memref<1x128x128xf32, #tpu.memory_space<vmem>>) attributes {dimension_semantics = [#tpu.dimension_semantics<parallel>], iteration_bounds = array<i64: 2>, scalar_prefetch = 0 : i64, scratch_operands = 0 : i64, tpu.core_type = #tpu.core_type<tc>, window_params = [{transform_indices = @transform_0, window_bounds = array<i64: 1, 128, 128>}, {transform_indices = @transform_1, window_bounds = array<i64: 1, 128, 128>}, {pipeline_mode = #tpu.pipeline_mode<synchronous>, transform_indices = @transform_2, window_bounds = array<i64: 128, 32>}, {pipeline_mode = #tpu.pipeline_mode<synchronous>, transform_indices = @transform_3, window_bounds = array<i64: 1, 32>}, {pipeline_mode = #tpu.pipeline_mode<synchronous>, transform_indices = @transform_4, window_bounds = array<i64: 32, 128>}, {pipeline_mode = #tpu.pipeline_mode<synchronous>, transform_indices = @transform_5, window_bounds = array<i64: 1, 128>}, {pipeline_mode = #tpu.pipeline_mode<synchronous>, transform_indices = @transform_6, window_bounds = array<i64: 128, 16>}, {pipeline_mode = #tpu.pipeline_mode<synchronous>, transform_indices = @transform_7, window_bounds = array<i64: 1, 16>}, {pipeline_mode = #tpu.pipeline_mode<synchronous>, transform_indices = @transform_8, window_bounds = array<i64: 16, 128>}, {pipeline_mode = #tpu.pipeline_mode<synchronous>, transform_indices = @transform_9, window_bounds = array<i64: 1, 128>}, {transform_indices = @transform_10, window_bounds = array<i64: 1, 128, 128>}]} {
    %c0 = arith.constant 0 : index
    %c0_0 = arith.constant 0 : index
    %c0_1 = arith.constant 0 : index
    %0 = vector.load %arg1[%c0, %c0_0, %c0_1] : memref<1x128x128xf32, #tpu.memory_space<vmem>>, vector<1x128x128xf32>
    %1 = vector.shape_cast %0 : vector<1x128x128xf32> to vector<128x128xf32>
    %c0_2 = arith.constant 0 : index
    %c0_3 = arith.constant 0 : index
    %c0_4 = arith.constant 0 : index
    %2 = vector.load %arg2[%c0_2, %c0_3, %c0_4] : memref<1x128x128xf32, #tpu.memory_space<vmem>>, vector<1x128x128xf32>
    %3 = vector.shape_cast %2 : vector<1x128x128xf32> to vector<128x128xf32>
    %4 = arith.addf %1, %3 : vector<128x128xf32>
    %cst = arith.constant dense<0.000000e+00> : vector<128xf32>
    %5 = vector.multi_reduction <add>, %4, %cst [0] : vector<128x128xf32> to vector<128xf32>
    %6 = vector.shape_cast %5 : vector<128xf32> to vector<1x128xf32>
    %cst_5 = arith.constant 3.906250e-03 : f32
    %7 = vector.broadcast %cst_5 : f32 to vector<1x128xf32>
    %8 = arith.mulf %6, %7 : vector<1x128xf32>
    %c0_6 = arith.constant 0 : index
    %c0_7 = arith.constant 0 : index
    %9 = vector.load %arg7[%c0_6, %c0_7] : memref<128x16xf32, #tpu.memory_space<vmem>>, vector<128x16xf32>
    %cst_8 = arith.constant dense<0.000000e+00> : vector<1x16xf32>
    %10 = tpu.matmul %8, %9, %cst_8 {dimension_numbers = #tpu.dot_dimension_numbers<[1], [0], [0], [1], [0, 0, 1, 1], [], []>} : vector<1x128xf32>, vector<128x16xf32>, vector<1x16xf32> -> vector<1x16xf32>
    %c0_9 = arith.constant 0 : index
    %c0_10 = arith.constant 0 : index
    %11 = vector.load %arg8[%c0_9, %c0_10] : memref<1x16xf32, #tpu.memory_space<vmem>>, vector<1x16xf32>
    %12 = arith.addf %10, %11 : vector<1x16xf32>
    %cst_11 = arith.constant 0.000000e+00 : f32
    %13 = vector.broadcast %cst_11 : f32 to vector<1x16xf32>
    %14 = arith.maximumf %12, %13 : vector<1x16xf32>
    %c0_12 = arith.constant 0 : index
    %c0_13 = arith.constant 0 : index
    %15 = vector.load %arg9[%c0_12, %c0_13] : memref<16x128xf32, #tpu.memory_space<vmem>>, vector<16x128xf32>
    %cst_14 = arith.constant dense<0.000000e+00> : vector<1x128xf32>
    %16 = tpu.matmul %14, %15, %cst_14 {dimension_numbers = #tpu.dot_dimension_numbers<[1], [0], [0], [1], [0, 0, 1, 1], [], []>} : vector<1x16xf32>, vector<16x128xf32>, vector<1x128xf32> -> vector<1x128xf32>
    %c0_15 = arith.constant 0 : index
    %c0_16 = arith.constant 0 : index
    %17 = vector.load %arg10[%c0_15, %c0_16] : memref<1x128xf32, #tpu.memory_space<vmem>>, vector<1x128xf32>
    %18 = arith.addf %16, %17 : vector<1x128xf32>
    %c0_17 = arith.constant 0 : index
    %c0_18 = arith.constant 0 : index
    %19 = vector.load %arg3[%c0_17, %c0_18] : memref<128x32xf32, #tpu.memory_space<vmem>>, vector<128x32xf32>
    %cst_19 = arith.constant dense<0.000000e+00> : vector<128x32xf32>
    %20 = tpu.matmul %4, %19, %cst_19 {dimension_numbers = #tpu.dot_dimension_numbers<[1], [0], [0], [1], [0, 0, 1, 1], [], []>} : vector<128x128xf32>, vector<128x32xf32>, vector<128x32xf32> -> vector<128x32xf32>
    %c0_20 = arith.constant 0 : index
    %c0_21 = arith.constant 0 : index
    %21 = vector.load %arg4[%c0_20, %c0_21] : memref<1x32xf32, #tpu.memory_space<vmem>>, vector<1x32xf32>
    %22 = vector.broadcast %21 : vector<1x32xf32> to vector<128x32xf32>
    %23 = arith.addf %20, %22 : vector<128x32xf32>
    %cst_22 = arith.constant 0.000000e+00 : f32
    %24 = vector.broadcast %cst_22 : f32 to vector<128x32xf32>
    %25 = arith.maximumf %23, %24 : vector<128x32xf32>
    %c0_23 = arith.constant 0 : index
    %c0_24 = arith.constant 0 : index
    %26 = vector.load %arg5[%c0_23, %c0_24] : memref<32x128xf32, #tpu.memory_space<vmem>>, vector<32x128xf32>
    %cst_25 = arith.constant dense<0.000000e+00> : vector<128x128xf32>
    %27 = tpu.matmul %25, %26, %cst_25 {dimension_numbers = #tpu.dot_dimension_numbers<[1], [0], [0], [1], [0, 0, 1, 1], [], []>} : vector<128x32xf32>, vector<32x128xf32>, vector<128x128xf32> -> vector<128x128xf32>
    %c0_26 = arith.constant 0 : index
    %c0_27 = arith.constant 0 : index
    %28 = vector.load %arg6[%c0_26, %c0_27] : memref<1x128xf32, #tpu.memory_space<vmem>>, vector<1x128xf32>
    %29 = vector.broadcast %28 : vector<1x128xf32> to vector<128x128xf32>
    %30 = arith.addf %27, %29 : vector<128x128xf32>
    %31 = vector.broadcast %18 : vector<1x128xf32> to vector<128x128xf32>
    %32 = arith.addf %30, %31 : vector<128x128xf32>
    %33 = arith.negf %32 : vector<128x128xf32>
    %34 = math.exp %33 : vector<128x128xf32>
    %cst_28 = arith.constant 1.000000e+00 : f32
    %35 = vector.broadcast %cst_28 : f32 to vector<128x128xf32>
    %36 = arith.addf %35, %34 : vector<128x128xf32>
    %37 = arith.divf %35, %36 : vector<128x128xf32>
    %cst_29 = arith.constant 2.000000e+00 : f32
    %38 = vector.broadcast %cst_29 : f32 to vector<128x128xf32>
    %39 = arith.mulf %38, %1 : vector<128x128xf32>
    %40 = arith.mulf %39, %37 : vector<128x128xf32>
    %cst_30 = arith.constant 2.000000e+00 : f32
    %41 = vector.broadcast %cst_30 : f32 to vector<128x128xf32>
    %42 = arith.mulf %41, %3 : vector<128x128xf32>
    %cst_31 = arith.constant 1.000000e+00 : f32
    %43 = vector.broadcast %cst_31 : f32 to vector<128x128xf32>
    %44 = arith.subf %43, %37 : vector<128x128xf32>
    %45 = arith.mulf %42, %44 : vector<128x128xf32>
    %46 = arith.addf %40, %45 : vector<128x128xf32>
    %c0_32 = arith.constant 0 : index
    %c0_33 = arith.constant 0 : index
    %c0_34 = arith.constant 0 : index
    %47 = vector.load %arg11[%c0_32, %c0_33, %c0_34] : memref<1x128x128xf32, #tpu.memory_space<vmem>>, vector<1x128x128xf32>
    %48 = vector.shape_cast %47 : vector<1x128x128xf32> to vector<128x128xf32>
    %49 = vector.shape_cast %46 : vector<128x128xf32> to vector<1x128x128xf32>
    tpu.vector_store %arg11[%c0_32, %c0_33, %c0_34], %49 {strides = array<i32>} : memref<1x128x128xf32, #tpu.memory_space<vmem>>, vector<1x128x128xf32>,
    return
  }
  func.func @transform_0(%arg0: i32) -> (i32, i32, i32) {
    %c0_i32 = arith.constant 0 : i32
    %c0_i32_0 = arith.constant 0 : i32
    %c0_i32_1 = arith.constant 0 : i32
    return %arg0, %c0_i32, %c0_i32_0 : i32, i32, i32
  }
  func.func @transform_1(%arg0: i32) -> (i32, i32, i32) {
    %c0_i32 = arith.constant 0 : i32
    %c0_i32_0 = arith.constant 0 : i32
    %c0_i32_1 = arith.constant 0 : i32
    return %arg0, %c0_i32, %c0_i32_0 : i32, i32, i32
  }
  func.func @transform_2(%arg0: i32) -> (i32, i32) {
    %c0_i32 = arith.constant 0 : i32
    %c0_i32_0 = arith.constant 0 : i32
    %c0_i32_1 = arith.constant 0 : i32
    return %c0_i32, %c0_i32_0 : i32, i32
  }
  func.func @transform_3(%arg0: i32) -> (i32, i32) {
    %c0_i32 = arith.constant 0 : i32
    %c0_i32_0 = arith.constant 0 : i32
    %c0_i32_1 = arith.constant 0 : i32
    return %c0_i32, %c0_i32_0 : i32, i32
  }
  func.func @transform_4(%arg0: i32) -> (i32, i32) {
    %c0_i32 = arith.constant 0 : i32
    %c0_i32_0 = arith.constant 0 : i32
    %c0_i32_1 = arith.constant 0 : i32
    return %c0_i32, %c0_i32_0 : i32, i32
  }
  func.func @transform_5(%arg0: i32) -> (i32, i32) {
    %c0_i32 = arith.constant 0 : i32
    %c0_i32_0 = arith.constant 0 : i32
    %c0_i32_1 = arith.constant 0 : i32
    return %c0_i32, %c0_i32_0 : i32, i32
  }
  func.func @transform_6(%arg0: i32) -> (i32, i32) {
    %c0_i32 = arith.constant 0 : i32
    %c0_i32_0 = arith.constant 0 : i32
    %c0_i32_1 = arith.constant 0 : i32
    return %c0_i32, %c0_i32_0 : i32, i32
  }
  func.func @transform_7(%arg0: i32) -> (i32, i32) {
    %c0_i32 = arith.constant 0 : i32
    %c0_i32_0 = arith.constant 0 : i32
    %c0_i32_1 = arith.constant 0 : i32
    return %c0_i32, %c0_i32_0 : i32, i32
  }
  func.func @transform_8(%arg0: i32) -> (i32, i32) {
    %c0_i32 = arith.constant 0 : i32
    %c0_i32_0 = arith.constant 0 : i32
    %c0_i32_1 = arith.constant 0 : i32
    return %c0_i32, %c0_i32_0 : i32, i32
  }
  func.func @transform_9(%arg0: i32) -> (i32, i32) {
    %c0_i32 = arith.constant 0 : i32
    %c0_i32_0 = arith.constant 0 : i32
    %c0_i32_1 = arith.constant 0 : i32
    return %c0_i32, %c0_i32_0 : i32, i32
  }
  func.func @transform_10(%arg0: i32) -> (i32, i32, i32) {
    %c0_i32 = arith.constant 0 : i32
    %c0_i32_0 = arith.constant 0 : i32
    %c0_i32_1 = arith.constant 0 : i32
    return %arg0, %c0_i32, %c0_i32_0 : i32, i32, i32
  }
}

</mosaic_0001>

<llo_original>
// kernel: tpu_custom_call.1
$region0: #{tpu_custom_call.1}
  #allocation0 [shape = 'u32[]', space=smem, size = 0x4, offset = 0x4, fixed_abs, tag = 'smem constant byte address 0x4 - core index']
  #allocation1 [shape = 'u32[144,128]{1,0:T(1,128)}', space=vmem, size = 0x12000, scoped, tag = 'internal scratch']
  %s0 = inlined_call_operand.vmem [shape: f32[2,128,128], index: 0, kind: input, shape index: {}]
  %s1 = inlined_call_operand.hbm [shape: f32[2,128,128], index: 1, kind: input, shape index: {}]
  %s2 = inlined_call_operand.vmem [shape: f32[128,32], index: 2, kind: input, shape index: {}]
  %s3 = inlined_call_operand.vmem [shape: f32[1,32], index: 3, kind: input, shape index: {}]
  %s4 = inlined_call_operand.vmem [shape: f32[32,128], index: 4, kind: input, shape index: {}]
  %s5 = inlined_call_operand.vmem [shape: f32[1,128], index: 5, kind: input, shape index: {}]
  %s6 = inlined_call_operand.vmem [shape: f32[128,16], index: 6, kind: input, shape index: {}]
  %s7 = inlined_call_operand.vmem [shape: f32[1,16], index: 7, kind: input, shape index: {}]
  %s8 = inlined_call_operand.vmem [shape: f32[16,128], index: 8, kind: input, shape index: {}]
  %s9 = inlined_call_operand.vmem [shape: f32[1,128], index: 9, kind: input, shape index: {}]
  %s10 = inlined_call_operand.hbm [shape: f32[2,128,128], index: 10, kind: output, shape index: {}]
  %s11 = sld [smem:[#allocation0]]
  $region77: #{tpu_custom_call.1} parent=0
    _
  %s13 = ssub.s32 1, %s11
  %s14 = scalar_select 0, %s13, %s11
  $region1: #{tpu_custom_call.1} parent=0
    #allocation2 [shape = 'u8[131072]{0}', space=vmem, size = 0x20000, scoped, tag = 'input window, operand 1']
    #allocation3 [shape = 's32[2]{0}', space=sflag, size = 0x8, scoped, tag = 'scoped memory for tpu_custom_call.1']
    #allocation4 [shape = 's32[2]{0}', space=sflag, size = 0x8, scoped, tag = 'scoped memory for tpu_custom_call.1']
    #allocation5 [shape = 'u8[131072]{0}', space=vmem, size = 0x20000, scoped, tag = 'output window, operand 0']
    %15 = vsyncpa [#allocation3], 0
    %s16 = scalar_lea.sflag [#allocation3], 1
    %17 = vsyncpa %s16, 0
    %18 = vsyncpa [#allocation4], 0
    %s19 = scalar_lea.sflag [#allocation4], 1
    %20 = vsyncpa %s19, 0
    loop: start=0, step=1, limit=4
    $region2: #{tpu_custom_call.1} parent=1 // loop_pre_header
      _
    $region3: #{tpu_custom_call.1} parent=1 // loop_header
      %s22 = sphi 0, %s26
      %p23 = scmp.ge.s32.totalorder %s22, 4
      %s32 = sphi 0, %s34
      %s35 = sphi 0, %s32
      %s36 = sphi 0, %s35
      %s52 = sphi 0, %s36
      %s58 = sphi 0, %s60
      %s61 = sphi 0, %s58
      %s62 = sphi 0, %s61
      %s78 = sphi 0, %s62
      %s82 = sphi 0, %s82
      %s84 = sphi 0, %s82
      %s85 = sphi 0, %s84
      %s99 = sphi 0, %s85
      %s103 = sphi 0, %s103
      %s105 = sphi 0, %s103
      %s106 = sphi 0, %s105
      %s120 = sphi 0, %s106
      %s124 = sphi 0, %s124
      %s126 = sphi 0, %s124
      %s127 = sphi 0, %s126
      %s141 = sphi 0, %s127
      %s145 = sphi 0, %s145
      %s147 = sphi 0, %s145
      %s148 = sphi 0, %s147
      %s162 = sphi 0, %s148
      %s166 = sphi 0, %s166
      %s168 = sphi 0, %s166
      %s169 = sphi 0, %s168
      %s183 = sphi 0, %s169
      %s187 = sphi 0, %s187
      %s189 = sphi 0, %s187
      %s190 = sphi 0, %s189
      %s204 = sphi 0, %s190
      %s208 = sphi 0, %s208
      %s210 = sphi 0, %s208
      %s211 = sphi 0, %s210
      %s225 = sphi 0, %s211
      %s229 = sphi 0, %s229
      %s231 = sphi 0, %s229
      %s232 = sphi 0, %s231
      %s246 = sphi 0, %s232
      %s252 = sphi 0, %s254
      %s255 = sphi 0, %s252
      %s256 = sphi 0, %s255
      %s272 = sphi 0, %s256
    $region4: #{tpu_custom_call.1} parent=1 // loop_header_branch
      %25 = sbr.rel (%p23) target = $region8
    $region5: #{tpu_custom_call.1} parent=1 // loop_body
      %s27 = ssub.s32 %s22, 1
      %s28 = ssub.s32 %s22, 2
      %s29 = sadd.s32 %s22, 1
      %s30 = ssub.s32 %s22, %s29
      %p31 = scmp.eq.s32.totalorder %s30, 0
      %s33 = sadd.s32 %s32, 1
      %s34 = scalar_select %p31, %s32, %s33
      %p37 = pneg %p31
      %p38 = scmp.eq.s32.totalorder %s22, 1
      %p39 = por %p37, %p38
      %p40 = scmp.ne.s32.totalorder %s32, %s35
      %p41 = scmp.eq.s32.totalorder %s22, 0
      %p42 = por %p40, %p41
      %p43 = scmp.ne.s32.totalorder %s32, %s35
      %p44 = scmp.eq.s32.totalorder %s27, 1
      %p45 = por %p43, %p44
      %p46 = scmp.ne.s32.totalorder %s35, %s36
      %p47 = scmp.eq.s32.totalorder %s27, 0
      %p48 = por %p46, %p47
      %p49 = scmp.ne.s32.totalorder %s35, %s36
      %p50 = scmp.eq.s32.totalorder %s28, 1
      %p51 = por %p49, %p50
      %p53 = scmp.ne.s32.totalorder %s36, %s52
      %p54 = scmp.eq.s32.totalorder %s28, 0
      %p55 = por %p53, %p54
      %s56 = ssub.s32 %s22, %s29
      %p57 = scmp.eq.s32.totalorder %s56, 0
      %s59 = sadd.s32 %s58, 1
      %s60 = scalar_select %p57, %s58, %s59
      %p63 = pneg %p57
      %p64 = scmp.eq.s32.totalorder %s22, 1
      %p65 = por %p63, %p64
      %p66 = scmp.ne.s32.totalorder %s58, %s61
      %p67 = scmp.eq.s32.totalorder %s22, 0
      %p68 = por %p66, %p67
      %p69 = scmp.ne.s32.totalorder %s58, %s61
      %p70 = scmp.eq.s32.totalorder %s27, 1
      %p71 = por %p69, %p70
      %p72 = scmp.ne.s32.totalorder %s61, %s62
      %p73 = scmp.eq.s32.totalorder %s27, 0
      %p74 = por %p72, %p73
      %p75 = scmp.ne.s32.totalorder %s61, %s62
      %p76 = scmp.eq.s32.totalorder %s28, 1
      %p77 = por %p75, %p76
      %p79 = scmp.ne.s32.totalorder %s62, %s78
      %p80 = scmp.eq.s32.totalorder %s28, 0
      %p81 = por %p79, %p80
      %s83 = sadd.s32 %s82, 1
      %p86 = scmp.eq.s32.totalorder %s22, 1
      %p87 = scmp.ne.s32.totalorder %s82, %s84
      %p88 = scmp.eq.s32.totalorder %s22, 0
      %p89 = por %p87, %p88
      %p90 = scmp.ne.s32.totalorder %s82, %s84
      %p91 = scmp.eq.s32.totalorder %s27, 1
      %p92 = por %p90, %p91
      %p93 = scmp.ne.s32.totalorder %s84, %s85
      %p94 = scmp.eq.s32.totalorder %s27, 0
      %p95 = por %p93, %p94
      %p96 = scmp.ne.s32.totalorder %s84, %s85
      %p97 = scmp.eq.s32.totalorder %s28, 1
      %p98 = por %p96, %p97
      %p100 = scmp.ne.s32.totalorder %s85, %s99
      %p101 = scmp.eq.s32.totalorder %s28, 0
      %p102 = por %p100, %p101
      %s104 = sadd.s32 %s103, 1
      %p107 = scmp.eq.s32.totalorder %s22, 1
      %p108 = scmp.ne.s32.totalorder %s103, %s105
      %p109 = scmp.eq.s32.totalorder %s22, 0
      %p110 = por %p108, %p109
      %p111 = scmp.ne.s32.totalorder %s103, %s105
      %p112 = scmp.eq.s32.totalorder %s27, 1
      %p113 = por %p111, %p112
      %p114 = scmp.ne.s32.totalorder %s105, %s106
      %p115 = scmp.eq.s32.totalorder %s27, 0
      %p116 = por %p114, %p115
      %p117 = scmp.ne.s32.totalorder %s105, %s106
      %p118 = scmp.eq.s32.totalorder %s28, 1
      %p119 = por %p117, %p118
      %p121 = scmp.ne.s32.totalorder %s106, %s120
      %p122 = scmp.eq.s32.totalorder %s28, 0
      %p123 = por %p121, %p122
      %s125 = sadd.s32 %s124, 1
      %p128 = scmp.eq.s32.totalorder %s22, 1
      %p129 = scmp.ne.s32.totalorder %s124, %s126
      %p130 = scmp.eq.s32.totalorder %s22, 0
      %p131 = por %p129, %p130
      %p132 = scmp.ne.s32.totalorder %s124, %s126
      %p133 = scmp.eq.s32.totalorder %s27, 1
      %p134 = por %p132, %p133
      %p135 = scmp.ne.s32.totalorder %s126, %s127
      %p136 = scmp.eq.s32.totalorder %s27, 0
      %p137 = por %p135, %p136
      %p138 = scmp.ne.s32.totalorder %s126, %s127
      %p139 = scmp.eq.s32.totalorder %s28, 1
      %p140 = por %p138, %p139
      %p142 = scmp.ne.s32.totalorder %s127, %s141
      %p143 = scmp.eq.s32.totalorder %s28, 0
      %p144 = por %p142, %p143
      %s146 = sadd.s32 %s145, 1
      %p149 = scmp.eq.s32.totalorder %s22, 1
      %p150 = scmp.ne.s32.totalorder %s145, %s147
      %p151 = scmp.eq.s32.totalorder %s22, 0
      %p152 = por %p150, %p151
      %p153 = scmp.ne.s32.totalorder %s145, %s147
      %p154 = scmp.eq.s32.totalorder %s27, 1
      %p155 = por %p153, %p154
      %p156 = scmp.ne.s32.totalorder %s147, %s148
      %p157 = scmp.eq.s32.totalorder %s27, 0
      %p158 = por %p156, %p157
      %p159 = scmp.ne.s32.totalorder %s147, %s148
      %p160 = scmp.eq.s32.totalorder %s28, 1
      %p161 = por %p159, %p160
      %p163 = scmp.ne.s32.totalorder %s148, %s162
      %p164 = scmp.eq.s32.totalorder %s28, 0
      %p165 = por %p163, %p164
      %s167 = sadd.s32 %s166, 1
      %p170 = scmp.eq.s32.totalorder %s22, 1
      %p171 = scmp.ne.s32.totalorder %s166, %s168
      %p172 = scmp.eq.s32.totalorder %s22, 0
      %p173 = por %p171, %p172
      %p174 = scmp.ne.s32.totalorder %s166, %s168
      %p175 = scmp.eq.s32.totalorder %s27, 1
      %p176 = por %p174, %p175
      %p177 = scmp.ne.s32.totalorder %s168, %s169
      %p178 = scmp.eq.s32.totalorder %s27, 0
      %p179 = por %p177, %p178
      %p180 = scmp.ne.s32.totalorder %s168, %s169
      %p181 = scmp.eq.s32.totalorder %s28, 1
      %p182 = por %p180, %p181
      %p184 = scmp.ne.s32.totalorder %s169, %s183
      %p185 = scmp.eq.s32.totalorder %s28, 0
      %p186 = por %p184, %p185
      %s188 = sadd.s32 %s187, 1
      %p191 = scmp.eq.s32.totalorder %s22, 1
      %p192 = scmp.ne.s32.totalorder %s187, %s189
      %p193 = scmp.eq.s32.totalorder %s22, 0
      %p194 = por %p192, %p193
      %p195 = scmp.ne.s32.totalorder %s187, %s189
      %p196 = scmp.eq.s32.totalorder %s27, 1
      %p197 = por %p195, %p196
      %p198 = scmp.ne.s32.totalorder %s189, %s190
      %p199 = scmp.eq.s32.totalorder %s27, 0
      %p200 = por %p198, %p199
      %p201 = scmp.ne.s32.totalorder %s189, %s190
      %p202 = scmp.eq.s32.totalorder %s28, 1
      %p203 = por %p201, %p202
      %p205 = scmp.ne.s32.totalorder %s190, %s204
      %p206 = scmp.eq.s32.totalorder %s28, 0
      %p207 = por %p205, %p206
      %s209 = sadd.s32 %s208, 1
      %p212 = scmp.eq.s32.totalorder %s22, 1
      %p213 = scmp.ne.s32.totalorder %s208, %s210
      %p214 = scmp.eq.s32.totalorder %s22, 0
      %p215 = por %p213, %p214
      %p216 = scmp.ne.s32.totalorder %s208, %s210
      %p217 = scmp.eq.s32.totalorder %s27, 1
      %p218 = por %p216, %p217
      %p219 = scmp.ne.s32.totalorder %s210, %s211
      %p220 = scmp.eq.s32.totalorder %s27, 0
      %p221 = por %p219, %p220
      %p222 = scmp.ne.s32.totalorder %s210, %s211
      %p223 = scmp.eq.s32.totalorder %s28, 1
      %p224 = por %p222, %p223
      %p226 = scmp.ne.s32.totalorder %s211, %s225
      %p227 = scmp.eq.s32.totalorder %s28, 0
      %p228 = por %p226, %p227
      %s230 = sadd.s32 %s229, 1
      %p233 = scmp.eq.s32.totalorder %s22, 1
      %p234 = scmp.ne.s32.totalorder %s229, %s231
      %p235 = scmp.eq.s32.totalorder %s22, 0
      %p236 = por %p234, %p235
      %p237 = scmp.ne.s32.totalorder %s229, %s231
      %p238 = scmp.eq.s32.totalorder %s27, 1
      %p239 = por %p237, %p238
      %p240 = scmp.ne.s32.totalorder %s231, %s232
      %p241 = scmp.eq.s32.totalorder %s27, 0
      %p242 = por %p240, %p241
      %p243 = scmp.ne.s32.totalorder %s231, %s232
      %p244 = scmp.eq.s32.totalorder %s28, 1
      %p245 = por %p243, %p244
      %p247 = scmp.ne.s32.totalorder %s232, %s246
      %p248 = scmp.eq.s32.totalorder %s28, 0
      %p249 = por %p247, %p248
      %s250 = ssub.s32 %s22, %s29
      %p251 = scmp.eq.s32.totalorder %s250, 0
      %s253 = sadd.s32 %s252, 1
      %s254 = scalar_select %p251, %s252, %s253
      %p257 = pneg %p251
      %p258 = scmp.eq.s32.totalorder %s22, 1
      %p259 = por %p257, %p258
      %p260 = scmp.ne.s32.totalorder %s252, %s255
      %p261 = scmp.eq.s32.totalorder %s22, 0
      %p262 = por %p260, %p261
      %p263 = scmp.ne.s32.totalorder %s252, %s255
      %p264 = scmp.eq.s32.totalorder %s27, 1
      %p265 = por %p263, %p264
      %p266 = scmp.ne.s32.totalorder %s255, %s256
      %p267 = scmp.eq.s32.totalorder %s27, 0
      %p268 = por %p266, %p267
      %p269 = scmp.ne.s32.totalorder %s255, %s256
      %p270 = scmp.eq.s32.totalorder %s28, 1
      %p271 = por %p269, %p270
      %p273 = scmp.ne.s32.totalorder %s256, %s272
      %p274 = scmp.eq.s32.totalorder %s28, 0
      %p275 = por %p273, %p274
      %p276 = scmp.le.s32.totalorder 1, %s22
      %p277 = scmp.lt.s32.totalorder %s22, 3
      %p278 = pnand %p276, %p277
      %p279 = pneg %p278
      // Predicated region
      $region9: #{tpu_custom_call.1} parent=5 // pred_check
        _
      $region10: #{tpu_custom_call.1} parent=5 // pred_check_branch
        %281 = sbr.rel (%p278) target = $region12
      $region11: #{tpu_custom_call.1} parent=5 // pred_region
        %s282 = ssub.s32 %s22, 1
        // Predicated region
        $region13: #{tpu_custom_call.1} parent=11 // pred_check
          %p283 = pneg %p95
        $region14: #{tpu_custom_call.1} parent=11 // pred_check_branch
          %285 = sbr.rel (%p283) target = $region16
        $region15: #{tpu_custom_call.1} parent=11 // pred_region
          _
        $region16: #{tpu_custom_call.1} parent=11 // pred_fallthru
          _
        // Predicated region
        $region17: #{tpu_custom_call.1} parent=11 // pred_check
          %p286 = pneg %p116
        $region18: #{tpu_custom_call.1} parent=11 // pred_check_branch
          %288 = sbr.rel (%p286) target = $region20
        $region19: #{tpu_custom_call.1} parent=11 // pred_region
          _
        $region20: #{tpu_custom_call.1} parent=11 // pred_fallthru
          _
        // Predicated region
        $region21: #{tpu_custom_call.1} parent=11 // pred_check
          %p289 = pneg %p137
        $region22: #{tpu_custom_call.1} parent=11 // pred_check_branch
          %291 = sbr.rel (%p289) target = $region24
        $region23: #{tpu_custom_call.1} parent=11 // pred_region
          _
        $region24: #{tpu_custom_call.1} parent=11 // pred_fallthru
          _
        // Predicated region
        $region25: #{tpu_custom_call.1} parent=11 // pred_check
          %p292 = pneg %p158
        $region26: #{tpu_custom_call.1} parent=11 // pred_check_branch
          %294 = sbr.rel (%p292) target = $region28
        $region27: #{tpu_custom_call.1} parent=11 // pred_region
          _
        $region28: #{tpu_custom_call.1} parent=11 // pred_fallthru
          _
        // Predicated region
        $region29: #{tpu_custom_call.1} parent=11 // pred_check
          %p295 = pneg %p179
        $region30: #{tpu_custom_call.1} parent=11 // pred_check_branch
          %297 = sbr.rel (%p295) target = $region32
        $region31: #{tpu_custom_call.1} parent=11 // pred_region
          _
        $region32: #{tpu_custom_call.1} parent=11 // pred_fallthru
          _
        // Predicated region
        $region33: #{tpu_custom_call.1} parent=11 // pred_check
          %p298 = pneg %p200
        $region34: #{tpu_custom_call.1} parent=11 // pred_check_branch
          %300 = sbr.rel (%p298) target = $region36
        $region35: #{tpu_custom_call.1} parent=11 // pred_region
          _
        $region36: #{tpu_custom_call.1} parent=11 // pred_fallthru
          _
        // Predicated region
        $region37: #{tpu_custom_call.1} parent=11 // pred_check
          %p301 = pneg %p221
        $region38: #{tpu_custom_call.1} parent=11 // pred_check_branch
          %303 = sbr.rel (%p301) target = $region40
        $region39: #{tpu_custom_call.1} parent=11 // pred_region
          _
        $region40: #{tpu_custom_call.1} parent=11 // pred_fallthru
          _
        // Predicated region
        $region41: #{tpu_custom_call.1} parent=11 // pred_check
          %p304 = pneg %p242
        $region42: #{tpu_custom_call.1} parent=11 // pred_check_branch
          %306 = sbr.rel (%p304) target = $region44
        $region43: #{tpu_custom_call.1} parent=11 // pred_region
          _
        $region44: #{tpu_custom_call.1} parent=11 // pred_fallthru
          _
      $region12: #{tpu_custom_call.1} parent=5 // pred_fallthru
        _
      %p307 = scmp.lt.s32.totalorder %s22, 2
      // Predicated region
      $region45: #{tpu_custom_call.1} parent=5 // pred_check
        %p308 = pneg %p307
      $region46: #{tpu_custom_call.1} parent=5 // pred_check_branch
        %310 = sbr.rel (%p308) target = $region48
      $region47: #{tpu_custom_call.1} parent=5 // pred_region
        // Predicated region
        $region49: #{tpu_custom_call.1} parent=47 // pred_check
          %p311 = pneg %p42
        $region50: #{tpu_custom_call.1} parent=47 // pred_check_branch
          %313 = sbr.rel (%p311) target = $region52
        $region51: #{tpu_custom_call.1} parent=47 // pred_region
          %p314 = scmp.lt.s32.totalorder %s22, 1
          %s315 = scalar_select %p314, %s22, 1
          %s316 = smul.addr %s315, 16
          %s317 = smul.addr %s316, 8
          %s318 = scalar_lea.vmem %s0, %s317
        $region52: #{tpu_custom_call.1} parent=47 // pred_fallthru
          _
        // Predicated region
        $region53: #{tpu_custom_call.1} parent=47 // pred_check
          %p319 = pneg %p68
        $region54: #{tpu_custom_call.1} parent=47 // pred_check_branch
          %321 = sbr.rel (%p319) target = $region56
        $region55: #{tpu_custom_call.1} parent=47 // pred_region
          %s322 = sand.u32 %s58, 1
          %s323 = scalar_lea.sflag [#allocation3], %s322
          %s324 = sand.u32 %s58, 1
          %s325 = smul.addr %s324, 128
          %s326 = scalar_lea.vmem [#allocation2], %s325
          %s328 = ssub.s32 2048, 2048
          %329 = vsyncadd %s323, %s328
          %s330 = smul.addr %s22, 16
          %s331 = smul.addr %s330, 128
          %s332 = scalar_lea.hbm %s1, %s331
          %s333 = sshll.u32 %s326, 4
          %s334 = int_to_ptr.vmem [resolvable:$true] %s333
          %339 = dma.hbm_to_vmem [thread:$0]  %s332, 2048, %s334, %s323, 128, 128, 8
        $region56: #{tpu_custom_call.1} parent=47 // pred_fallthru
          _
      $region48: #{tpu_custom_call.1} parent=5 // pred_fallthru
        _
      %p340 = scmp.le.s32.totalorder 1, %s22
      %p341 = scmp.lt.s32.totalorder %s22, 3
      %p342 = pnand %p340, %p341
      %p343 = pneg %p342
      // Predicated region
      $region57: #{tpu_custom_call.1} parent=5 // pred_check
        _
      $region58: #{tpu_custom_call.1} parent=5 // pred_check_branch
        %345 = sbr.rel (%p342) target = $region60
      $region59: #{tpu_custom_call.1} parent=5 // pred_region
        %s346 = ssub.s32 %s22, 1
        %s347 = sand.u32 %s61, 1
        %s348 = scalar_lea.sflag [#allocation3], %s347
        %s349 = sand.u32 %s61, 1
        %s350 = smul.addr %s349, 128
        %s351 = scalar_lea.vmem [#allocation2], %s350
        // Predicated region
        $region61: #{tpu_custom_call.1} parent=59 // pred_check
          %p352 = pneg %p74
        $region62: #{tpu_custom_call.1} parent=59 // pred_check_branch
          %354 = sbr.rel (%p352) target = $region64
        $region63: #{tpu_custom_call.1} parent=59 // pred_region
          %355 = dma.done %s348, 2048
        $region64: #{tpu_custom_call.1} parent=59 // pred_fallthru
          _
        %p356 = scmp.lt.s32.totalorder %s27, 1
        %s357 = scalar_select %p356, %s27, 1
        %s358 = smul.addr %s357, 16
        %s359 = smul.addr %s358, 8
        %s360 = scalar_lea.vmem %s0, %s359
        %p361 = pneg %p48
        %p362 = pneg %p45
        %s363 = sand.u32 %s61, 1
        %s364 = scalar_lea.sflag [#allocation3], %s363
        %s365 = sand.u32 %s61, 1
        %s366 = smul.addr %s365, 128
        %s367 = scalar_lea.vmem [#allocation2], %s366
        %p368 = pneg %p74
        %p369 = pneg %p71
        %p370 = pneg %p95
        %p371 = pneg %p92
        %p372 = pneg %p116
        %p373 = pneg %p113
        %p374 = pneg %p137
        %p375 = pneg %p134
        %p376 = pneg %p158
        %p377 = pneg %p155
        %p378 = pneg %p179
        %p379 = pneg %p176
        %p380 = pneg %p200
        %p381 = pneg %p197
        %p382 = pneg %p221
        %p383 = pneg %p218
        %p384 = pneg %p242
        %p385 = pneg %p239
        %p386 = pneg %p268
        %p387 = pneg %p265
        %s388 = sand.u32 %s255, 1
        %s389 = scalar_lea.sflag [#allocation4], %s388
        %s390 = sand.u32 %s255, 1
        %s391 = smul.addr %s390, 128
        %s392 = scalar_lea.vmem [#allocation5], %s391
        %p393 = scmp.lt.s32.totalorder %s27, 1
        %s394 = scalar_select %p393, %s27, 1
        %s395 = smul.addr %s394, 16
        %s396 = smul.addr %s395, 8
        %s397 = scalar_lea.vmem %s0, %s396
        %v398 = vld [vmem:[%s397] sm:$0xff]
        %v399 = vld [vmem:[%s397 + $0x8] sm:$0xff]
        %v400 = vld [vmem:[%s397 + $0x10] sm:$0xff]
        %v401 = vld [vmem:[%s397 + $0x18] sm:$0xff]
        %v402 = vld [vmem:[%s397 + $0x20] sm:$0xff]
        %v403 = vld [vmem:[%s397 + $0x28] sm:$0xff]
        %v404 = vld [vmem:[%s397 + $0x30] sm:$0xff]
        %v405 = vld [vmem:[%s397 + $0x38] sm:$0xff]
        %v406 = vld [vmem:[%s397 + $0x40] sm:$0xff]
        %v407 = vld [vmem:[%s397 + $0x48] sm:$0xff]
        %v408 = vld [vmem:[%s397 + $0x50] sm:$0xff]
        %v409 = vld [vmem:[%s397 + $0x58] sm:$0xff]
        %v410 = vld [vmem:[%s397 + $0x60] sm:$0xff]
        %v411 = vld [vmem:[%s397 + $0x68] sm:$0xff]
        %v412 = vld [vmem:[%s397 + $0x70] sm:$0xff]
        %v413 = vld [vmem:[%s397 + $0x78] sm:$0xff]
        %v414 = vld [vmem:[%s351] sm:$0xff]
        %v415 = vld [vmem:[%s351 + $0x8] sm:$0xff]
        %v416 = vld [vmem:[%s351 + $0x10] sm:$0xff]
        %v417 = vld [vmem:[%s351 + $0x18] sm:$0xff]
        %v418 = vld [vmem:[%s351 + $0x20] sm:$0xff]
        %v419 = vld [vmem:[%s351 + $0x28] sm:$0xff]
        %v420 = vld [vmem:[%s351 + $0x30] sm:$0xff]
        %v421 = vld [vmem:[%s351 + $0x38] sm:$0xff]
        %v422 = vld [vmem:[%s351 + $0x40] sm:$0xff]
        %v423 = vld [vmem:[%s351 + $0x48] sm:$0xff]
        %v424 = vld [vmem:[%s351 + $0x50] sm:$0xff]
        %v425 = vld [vmem:[%s351 + $0x58] sm:$0xff]
        %v426 = vld [vmem:[%s351 + $0x60] sm:$0xff]
        %v427 = vld [vmem:[%s351 + $0x68] sm:$0xff]
        %v428 = vld [vmem:[%s351 + $0x70] sm:$0xff]
        %v429 = vld [vmem:[%s351 + $0x78] sm:$0xff]
        %v430 = vadd.f32 %v398, %v414
        %v431 = vadd.f32 %v399, %v415
        %v432 = vadd.f32 %v400, %v416
        %v433 = vadd.f32 %v401, %v417
        %v434 = vadd.f32 %v402, %v418
        %v435 = vadd.f32 %v403, %v419
        %v436 = vadd.f32 %v404, %v420
        %v437 = vadd.f32 %v405, %v421
        %v438 = vadd.f32 %v406, %v422
        %v439 = vadd.f32 %v407, %v423
        %v440 = vadd.f32 %v408, %v424
        %v441 = vadd.f32 %v409, %v425
        %v442 = vadd.f32 %v410, %v426
        %v443 = vadd.f32 %v411, %v427
        %v444 = vadd.f32 %v412, %v428
        %v445 = vadd.f32 %v413, %v429
        %v446 = vadd.f32 %v430, %v431
        %v447 = vadd.f32 %v446, %v432
        %v448 = vadd.f32 %v447, %v433
        %v449 = vadd.f32 %v448, %v434
        %v450 = vadd.f32 %v449, %v435
        %v451 = vadd.f32 %v450, %v436
        %v452 = vadd.f32 %v451, %v437
        %v453 = vadd.f32 %v452, %v438
        %v454 = vadd.f32 %v453, %v439
        %v455 = vadd.f32 %v454, %v440
        %v456 = vadd.f32 %v455, %v441
        %v457 = vadd.f32 %v456, %v442
        %v458 = vadd.f32 %v457, %v443
        %v459 = vadd.f32 %v458, %v444
        %v460 = vadd.f32 %v459, %v445
        %v461 = vrot.slane %v460, 4
        %v462 = vadd.f32 %v460, %v461
        %v463 = vrot.slane %v462, 2
        %v464 = vadd.f32 %v462, %v463
        %v465 = vrot.slane %v464, 1
        %v466 = vadd.f32 %v464, %v465
        %v467 = vmul.f32 %v466, 0.00390625
        %v468 = vld [vmem:[%s6] sm:$0xff]
        %v469 = vld [vmem:[%s6 + $0x8] sm:$0xff]
        %v470 = vld [vmem:[%s6 + $0x10] sm:$0xff]
        %v471 = vld [vmem:[%s6 + $0x18] sm:$0xff]
        %v472 = vld [vmem:[%s6 + $0x20] sm:$0xff]
        %v473 = vld [vmem:[%s6 + $0x28] sm:$0xff]
        %v474 = vld [vmem:[%s6 + $0x30] sm:$0xff]
        %v475 = vld [vmem:[%s6 + $0x38] sm:$0xff]
        %v476 = vld [vmem:[%s6 + $0x40] sm:$0xff]
        %v477 = vld [vmem:[%s6 + $0x48] sm:$0xff]
        %v478 = vld [vmem:[%s6 + $0x50] sm:$0xff]
        %v479 = vld [vmem:[%s6 + $0x58] sm:$0xff]
        %v480 = vld [vmem:[%s6 + $0x60] sm:$0xff]
        %v481 = vld [vmem:[%s6 + $0x68] sm:$0xff]
        %v482 = vld [vmem:[%s6 + $0x70] sm:$0xff]
        %v483 = vld [vmem:[%s6 + $0x78] sm:$0xff]
        %v484 = vld [vmem:[%s7] sm:$0x1]
        %485 = vmatprep.subr.mxu0 0.0
        %486 = vmatpush1.msra.mxu0 %v468
        %487 = vmatprep.subr.mxu0 0.0
        %488 = vmatpush1.msra.mxu0 %v469
        %489 = vmatprep.subr.mxu0 0.0
        %490 = vmatpush1.msra.mxu0 %v470
        %491 = vmatprep.subr.mxu0 0.0
        %492 = vmatpush1.msra.mxu0 %v471
        %493 = vmatprep.subr.mxu0 0.0
        %494 = vmatpush1.msra.mxu0 %v472
        %495 = vmatprep.subr.mxu0 0.0
        %496 = vmatpush1.msra.mxu0 %v473
        %497 = vmatprep.subr.mxu0 0.0
        %498 = vmatpush1.msra.mxu0 %v474
        %499 = vmatprep.subr.mxu0 0.0
        %500 = vmatpush1.msra.mxu0 %v475
        %501 = vmatprep.subr.mxu0 0.0
        %502 = vmatpush1.msra.mxu0 %v476
        %503 = vmatprep.subr.mxu0 0.0
        %504 = vmatpush1.msra.mxu0 %v477
        %505 = vmatprep.subr.mxu0 0.0
        %506 = vmatpush1.msra.mxu0 %v478
        %507 = vmatprep.subr.mxu0 0.0
        %508 = vmatpush1.msra.mxu0 %v479
        %509 = vmatprep.subr.mxu0 0.0
        %510 = vmatpush1.msra.mxu0 %v480
        %511 = vmatprep.subr.mxu0 0.0
        %512 = vmatpush1.msra.mxu0 %v481
        %513 = vmatprep.subr.mxu0 0.0
        %514 = vmatpush1.msra.mxu0 %v482
        %515 = vmatprep.subr.mxu0 0.0
        %516 = vmatpush1.msra.mxu0 %v483
        %517 = vmatprep.subr.mxu0 0.0
        %518 = vmatpush1.msra.mxu0 0.0
        %519 = vmatprep.subr.mxu0 0.0
        %520 = vmatpush1.msra.mxu0 0.0
        %521 = vmatprep.subr.mxu0 0.0
        %522 = vmatpush1.msra.mxu0 0.0
        %523 = vmatprep.subr.mxu0 0.0
        %524 = vmatpush1.msra.mxu0 0.0
        %525 = vmatprep.subr.mxu0 0.0
        %526 = vmatpush1.msra.mxu0 0.0
        %527 = vmatprep.subr.mxu0 0.0
        %528 = vmatpush1.msra.mxu0 0.0
        %529 = vmatprep.subr.mxu0 0.0
        %530 = vmatpush1.msra.mxu0 0.0
        %531 = vmatprep.subr.mxu0 0.0
        %532 = vmatpush1.msra.mxu0 0.0
        %533 = vmatprep.subr.mxu0 0.0
        %534 = vmatpush1.msra.mxu0 0.0
        %535 = vmatprep.subr.mxu0 0.0
        %536 = vmatpush1.msra.mxu0 0.0
        %537 = vmatprep.subr.mxu0 0.0
        %538 = vmatpush1.msra.mxu0 0.0
        %539 = vmatprep.subr.mxu0 0.0
        %540 = vmatpush1.msra.mxu0 0.0
        %541 = vmatprep.subr.mxu0 0.0
        %542 = vmatpush1.msra.mxu0 0.0
        %543 = vmatprep.subr.mxu0 0.0
        %544 = vmatpush1.msra.mxu0 0.0
        %545 = vmatprep.subr.mxu0 0.0
        %546 = vmatpush1.msra.mxu0 0.0
        %547 = vmatprep.subr.mxu0 0.0
        %548 = vmatpush1.msra.mxu0 0.0
        %549 = vmatprep.mubr.f32.mxu0 0.0
        %550 = vmatmul.mubr.f32.gmra.mrb[0].mxu0 %v467
        %v551 = vpop.f32.mrb[0].mxu0
        %v552 = vadd.f32 %v484, %v551
        %v553 = vpop.f32.mrb[0].mxu0
        %554 = vdwg.mxu0
        %v555 = vmax.f32 %v552, 0.0
        %v556 = vld [vmem:[%s8] sm:$0xff]
        %v557 = vld [vmem:[%s8 + $0x8] sm:$0xff]
        %v558 = vld [vmem:[%s9] sm:$0x1]
        %vm559 = vcmask 130048
        %v561 = vsel %vm559, %v555, 0
        %563 = vmatprep.subr.mxu0 0.0
        %564 = vmatpush1.msra.mxu0 %v556
        %565 = vmatprep.subr.mxu0 0.0
        %566 = vmatpush1.msra.mxu0 %v557
        %567 = vmatprep.subr.mxu0 0.0
        %568 = vmatpush1.msra.mxu0 0.0
        %569 = vmatprep.subr.mxu0 0.0
        %570 = vmatpush1.msra.mxu0 0.0
        %571 = vmatprep.subr.mxu0 0.0
        %572 = vmatpush1.msra.mxu0 0.0
        %573 = vmatprep.subr.mxu0 0.0
        %574 = vmatpush1.msra.mxu0 0.0
        %575 = vmatprep.subr.mxu0 0.0
        %576 = vmatpush1.msra.mxu0 0.0
        %577 = vmatprep.subr.mxu0 0.0
        %578 = vmatpush1.msra.mxu0 0.0
        %579 = vmatprep.subr.mxu0 0.0
        %580 = vmatpush1.msra.mxu0 0.0
        %581 = vmatprep.subr.mxu0 0.0
        %582 = vmatpush1.msra.mxu0 0.0
        %583 = vmatprep.subr.mxu0 0.0
        %584 = vmatpush1.msra.mxu0 0.0
        %585 = vmatprep.subr.mxu0 0.0
        %586 = vmatpush1.msra.mxu0 0.0
        %587 = vmatprep.subr.mxu0 0.0
        %588 = vmatpush1.msra.mxu0 0.0
        %589 = vmatprep.subr.mxu0 0.0
        %590 = vmatpush1.msra.mxu0 0.0
        %591 = vmatprep.subr.mxu0 0.0
        %592 = vmatpush1.msra.mxu0 0.0
        %593 = vmatprep.subr.mxu0 0.0
        %594 = vmatpush1.msra.mxu0 0.0
        %595 = vmatprep.subr.mxu0 0.0
        %596 = vmatpush1.msra.mxu0 0.0
        %597 = vmatprep.subr.mxu0 0.0
        %598 = vmatpush1.msra.mxu0 0.0
        %599 = vmatprep.subr.mxu0 0.0
        %600 = vmatpush1.msra.mxu0 0.0
        %601 = vmatprep.subr.mxu0 0.0
        %602 = vmatpush1.msra.mxu0 0.0
        %603 = vmatprep.subr.mxu0 0.0
        %604 = vmatpush1.msra.mxu0 0.0
        %605 = vmatprep.subr.mxu0 0.0
        %606 = vmatpush1.msra.mxu0 0.0
        %607 = vmatprep.subr.mxu0 0.0
        %608 = vmatpush1.msra.mxu0 0.0
        %609 = vmatprep.subr.mxu0 0.0
        %610 = vmatpush1.msra.mxu0 0.0
        %611 = vmatprep.subr.mxu0 0.0
        %612 = vmatpush1.msra.mxu0 0.0
        %613 = vmatprep.subr.mxu0 0.0
        %614 = vmatpush1.msra.mxu0 0.0
        %615 = vmatprep.subr.mxu0 0.0
        %616 = vmatpush1.msra.mxu0 0.0
        %617 = vmatprep.subr.mxu0 0.0
        %618 = vmatpush1.msra.mxu0 0.0
        %619 = vmatprep.subr.mxu0 0.0
        %620 = vmatpush1.msra.mxu0 0.0
        %621 = vmatprep.subr.mxu0 0.0
        %622 = vmatpush1.msra.mxu0 0.0
        %623 = vmatprep.subr.mxu0 0.0
        %624 = vmatpush1.msra.mxu0 0.0
        %625 = vmatprep.subr.mxu0 0.0
        %626 = vmatpush1.msra.mxu0 0.0
        %627 = vmatprep.mubr.f32.mxu0 0.0
        %628 = vmatmul.mubr.f32.gmra.mrb[0].mxu0 %v561
        %v629 = vpop.f32.mrb[0].mxu0
        %v630 = vadd.f32 %v558, %v629
        %v631 = vpop.f32.mrb[0].mxu0
        %632 = vdwg.mxu0
        %v633 = vld [vmem:[%s2] sm:$0xff]
        %v634 = vld [vmem:[%s2 + $0x8] sm:$0xff]
        %v635 = vld [vmem:[%s2 + $0x10] sm:$0xff]
        %v636 = vld [vmem:[%s2 + $0x18] sm:$0xff]
        %v637 = vld [vmem:[%s2 + $0x20] sm:$0xff]
        %v638 = vld [vmem:[%s2 + $0x28] sm:$0xff]
        %v639 = vld [vmem:[%s2 + $0x30] sm:$0xff]
        %v640 = vld [vmem:[%s2 + $0x38] sm:$0xff]
        %v641 = vld [vmem:[%s2 + $0x40] sm:$0xff]
        %v642 = vld [vmem:[%s2 + $0x48] sm:$0xff]
        %v643 = vld [vmem:[%s2 + $0x50] sm:$0xff]
        %v644 = vld [vmem:[%s2 + $0x58] sm:$0xff]
        %v645 = vld [vmem:[%s2 + $0x60] sm:$0xff]
        %v646 = vld [vmem:[%s2 + $0x68] sm:$0xff]
        %v647 = vld [vmem:[%s2 + $0x70] sm:$0xff]
        %v648 = vld [vmem:[%s2 + $0x78] sm:$0xff]
        %v649 = vld [vmem:[%s3] sm:$0x1]
        %v651 = vlaneseq
        %v652 = vshrl.u32 %v651, 7
        %v653 = vsub.s32 0, %v652
        %v654 = vrot.slane %v649, %v653
        %656 = vmatprep.subr.mxu0 0.0
        %657 = vmatpush1.msra.mxu0 %v633
        %658 = vmatprep.subr.mxu0 0.0
        %659 = vmatpush1.msra.mxu0 %v634
        %660 = vmatprep.subr.mxu0 0.0
        %661 = vmatpush1.msra.mxu0 %v635
        %662 = vmatprep.subr.mxu0 0.0
        %663 = vmatpush1.msra.mxu0 %v636
        %664 = vmatprep.subr.mxu0 0.0
        %665 = vmatpush1.msra.mxu0 %v637
        %666 = vmatprep.subr.mxu0 0.0
        %667 = vmatpush1.msra.mxu0 %v638
        %668 = vmatprep.subr.mxu0 0.0
        %669 = vmatpush1.msra.mxu0 %v639
        %670 = vmatprep.subr.mxu0 0.0
        %671 = vmatpush1.msra.mxu0 %v640
        %672 = vmatprep.subr.mxu0 0.0
        %673 = vmatpush1.msra.mxu0 %v641
        %674 = vmatprep.subr.mxu0 0.0
        %675 = vmatpush1.msra.mxu0 %v642
        %676 = vmatprep.subr.mxu0 0.0
        %677 = vmatpush1.msra.mxu0 %v643
        %678 = vmatprep.subr.mxu0 0.0
        %679 = vmatpush1.msra.mxu0 %v644
        %680 = vmatprep.subr.mxu0 0.0
        %681 = vmatpush1.msra.mxu0 %v645
        %682 = vmatprep.subr.mxu0 0.0
        %683 = vmatpush1.msra.mxu0 %v646
        %684 = vmatprep.subr.mxu0 0.0
        %685 = vmatpush1.msra.mxu0 %v647
        %686 = vmatprep.subr.mxu0 0.0
        %687 = vmatpush1.msra.mxu0 %v648
        %688 = vmatprep.subr.mxu0 0.0
        %689 = vmatpush1.msra.mxu0 0.0
        %690 = vmatprep.subr.mxu0 0.0
        %691 = vmatpush1.msra.mxu0 0.0
        %692 = vmatprep.subr.mxu0 0.0
        %693 = vmatpush1.msra.mxu0 0.0
        %694 = vmatprep.subr.mxu0 0.0
        %695 = vmatpush1.msra.mxu0 0.0
        %696 = vmatprep.subr.mxu0 0.0
        %697 = vmatpush1.msra.mxu0 0.0
        %698 = vmatprep.subr.mxu0 0.0
        %699 = vmatpush1.msra.mxu0 0.0
        %700 = vmatprep.subr.mxu0 0.0
        %701 = vmatpush1.msra.mxu0 0.0
        %702 = vmatprep.subr.mxu0 0.0
        %703 = vmatpush1.msra.mxu0 0.0
        %704 = vmatprep.subr.mxu0 0.0
        %705 = vmatpush1.msra.mxu0 0.0
        %706 = vmatprep.subr.mxu0 0.0
        %707 = vmatpush1.msra.mxu0 0.0
        %708 = vmatprep.subr.mxu0 0.0
        %709 = vmatpush1.msra.mxu0 0.0
        %710 = vmatprep.subr.mxu0 0.0
        %711 = vmatpush1.msra.mxu0 0.0
        %712 = vmatprep.subr.mxu0 0.0
        %713 = vmatpush1.msra.mxu0 0.0
        %714 = vmatprep.subr.mxu0 0.0
        %715 = vmatpush1.msra.mxu0 0.0
        %716 = vmatprep.subr.mxu0 0.0
        %717 = vmatpush1.msra.mxu0 0.0
        %718 = vmatprep.subr.mxu0 0.0
        %719 = vmatpush1.msra.mxu0 0.0
        %720 = vmatprep.mubr.f32.mxu0 0.0
        %721 = vmatmul.mubr.f32.gmra.mrb[0].mxu0 %v430
        %v722 = vpop.f32.mrb[0].mxu0
        %v723 = vadd.f32 %v654, %v722
        %v724 = vpop.f32.mrb[0].mxu0
        %725 = vmatprep.mubr.f32.mxu0 0.0
        %726 = vmatmul.mubr.f32.gmra.mrb[0].mxu0 %v431
        %v727 = vpop.f32.mrb[0].mxu0
        %v728 = vadd.f32 %v654, %v727
        %v729 = vpop.f32.mrb[0].mxu0
        %730 = vmatprep.mubr.f32.mxu0 0.0
        %731 = vmatmul.mubr.f32.gmra.mrb[0].mxu0 %v432
        %v732 = vpop.f32.mrb[0].mxu0
        %v733 = vadd.f32 %v654, %v732
        %v734 = vpop.f32.mrb[0].mxu0
        %735 = vmatprep.mubr.f32.mxu0 0.0
        %736 = vmatmul.mubr.f32.gmra.mrb[0].mxu0 %v433
        %v737 = vpop.f32.mrb[0].mxu0
        %v738 = vadd.f32 %v654, %v737
        %v739 = vpop.f32.mrb[0].mxu0
        %740 = vmatprep.mubr.f32.mxu0 0.0
        %741 = vmatmul.mubr.f32.gmra.mrb[0].mxu0 %v434
        %v742 = vpop.f32.mrb[0].mxu0
        %v743 = vadd.f32 %v654, %v742
        %v744 = vpop.f32.mrb[0].mxu0
        %745 = vmatprep.mubr.f32.mxu0 0.0
        %746 = vmatmul.mubr.f32.gmra.mrb[0].mxu0 %v435
        %v747 = vpop.f32.mrb[0].mxu0
        %v748 = vadd.f32 %v654, %v747
        %v749 = vpop.f32.mrb[0].mxu0
        %750 = vmatprep.mubr.f32.mxu0 0.0
        %751 = vmatmul.mubr.f32.gmra.mrb[0].mxu0 %v436
        %v752 = vpop.f32.mrb[0].mxu0
        %v753 = vadd.f32 %v654, %v752
        %v754 = vpop.f32.mrb[0].mxu0
        %755 = vmatprep.mubr.f32.mxu0 0.0
        %756 = vmatmul.mubr.f32.gmra.mrb[0].mxu0 %v437
        %v757 = vpop.f32.mrb[0].mxu0
        %v758 = vadd.f32 %v654, %v757
        %v759 = vpop.f32.mrb[0].mxu0
        %760 = vmatprep.mubr.f32.mxu0 0.0
        %761 = vmatmul.mubr.f32.gmra.mrb[0].mxu0 %v438
        %v762 = vpop.f32.mrb[0].mxu0
        %v763 = vadd.f32 %v654, %v762
        %v764 = vpop.f32.mrb[0].mxu0
        %765 = vmatprep.mubr.f32.mxu0 0.0
        %766 = vmatmul.mubr.f32.gmra.mrb[0].mxu0 %v439
        %v767 = vpop.f32.mrb[0].mxu0
        %v768 = vadd.f32 %v654, %v767
        %v769 = vpop.f32.mrb[0].mxu0
        %770 = vmatprep.mubr.f32.mxu0 0.0
        %771 = vmatmul.mubr.f32.gmra.mrb[0].mxu0 %v440
        %v772 = vpop.f32.mrb[0].mxu0
        %v773 = vadd.f32 %v654, %v772
        %v774 = vpop.f32.mrb[0].mxu0
        %775 = vmatprep.mubr.f32.mxu0 0.0
        %776 = vmatmul.mubr.f32.gmra.mrb[0].mxu0 %v441
        %v777 = vpop.f32.mrb[0].mxu0
        %v778 = vadd.f32 %v654, %v777
        %v779 = vpop.f32.mrb[0].mxu0
        %780 = vmatprep.mubr.f32.mxu0 0.0
        %781 = vmatmul.mubr.f32.gmra.mrb[0].mxu0 %v442
        %v782 = vpop.f32.mrb[0].mxu0
        %v783 = vadd.f32 %v654, %v782
        %v784 = vpop.f32.mrb[0].mxu0
        %785 = vmatprep.mubr.f32.mxu0 0.0
        %786 = vmatmul.mubr.f32.gmra.mrb[0].mxu0 %v443
        %v787 = vpop.f32.mrb[0].mxu0
        %v788 = vadd.f32 %v654, %v787
        %v789 = vpop.f32.mrb[0].mxu0
        %790 = vmatprep.mubr.f32.mxu0 0.0
        %791 = vmatmul.mubr.f32.gmra.mrb[0].mxu0 %v444
        %v792 = vpop.f32.mrb[0].mxu0
        %v793 = vadd.f32 %v654, %v792
        %v794 = vpop.f32.mrb[0].mxu0
        %795 = vmatprep.mubr.f32.mxu0 0.0
        %796 = vmatmul.mubr.f32.gmra.mrb[0].mxu0 %v445
        %v797 = vpop.f32.mrb[0].mxu0
        %v798 = vadd.f32 %v654, %v797
        %v799 = vpop.f32.mrb[0].mxu0
        %800 = vdwg.mxu0
        %v801 = vmax.f32 %v723, 0.0
        %v802 = vmax.f32 %v728, 0.0
        %v803 = vmax.f32 %v733, 0.0
        %v804 = vmax.f32 %v738, 0.0
        %v805 = vmax.f32 %v743, 0.0
        %v806 = vmax.f32 %v748, 0.0
        %v807 = vmax.f32 %v753, 0.0
        %v808 = vmax.f32 %v758, 0.0
        %v809 = vmax.f32 %v763, 0.0
        %v810 = vmax.f32 %v768, 0.0
        %v811 = vmax.f32 %v773, 0.0
        %v812 = vmax.f32 %v778, 0.0
        %v813 = vmax.f32 %v783, 0.0
        %v814 = vmax.f32 %v788, 0.0
        %v815 = vmax.f32 %v793, 0.0
        %v816 = vmax.f32 %v798, 0.0
        %v817 = vld [vmem:[%s4] sm:$0xff]
        %v818 = vld [vmem:[%s4 + $0x8] sm:$0xff]
        %v819 = vld [vmem:[%s4 + $0x10] sm:$0xff]
        %v820 = vld [vmem:[%s4 + $0x18] sm:$0xff]
        %v821 = vld [vmem:[%s5] sm:$0x1]
        %v823 = vlaneseq
        %v824 = vshrl.u32 %v823, 7
        %v825 = vsub.s32 0, %v824
        %v826 = vrot.slane %v821, %v825
        %vm828 = vcmask 261120
        %v830 = vsel %vm828, %v801, 0
        %v833 = vsel %vm828, %v802, 0
        %v836 = vsel %vm828, %v803, 0
        %v839 = vsel %vm828, %v804, 0
        %v842 = vsel %vm828, %v805, 0
        %v845 = vsel %vm828, %v806, 0
        %v848 = vsel %vm828, %v807, 0
        %v851 = vsel %vm828, %v808, 0
        %v854 = vsel %vm828, %v809, 0
        %v857 = vsel %vm828, %v810, 0
        %v860 = vsel %vm828, %v811, 0
        %v863 = vsel %vm828, %v812, 0
        %v866 = vsel %vm828, %v813, 0
        %v869 = vsel %vm828, %v814, 0
        %v872 = vsel %vm828, %v815, 0
        %v875 = vsel %vm828, %v816, 0
        %877 = vmatprep.subr.mxu0 0.0
        %878 = vmatpush1.msra.mxu0 %v817
        %879 = vmatprep.subr.mxu0 0.0
        %880 = vmatpush1.msra.mxu0 %v818
        %881 = vmatprep.subr.mxu0 0.0
        %882 = vmatpush1.msra.mxu0 %v819
        %883 = vmatprep.subr.mxu0 0.0
        %884 = vmatpush1.msra.mxu0 %v820
        %885 = vmatprep.subr.mxu0 0.0
        %886 = vmatpush1.msra.mxu0 0.0
        %887 = vmatprep.subr.mxu0 0.0
        %888 = vmatpush1.msra.mxu0 0.0
        %889 = vmatprep.subr.mxu0 0.0
        %890 = vmatpush1.msra.mxu0 0.0
        %891 = vmatprep.subr.mxu0 0.0
        %892 = vmatpush1.msra.mxu0 0.0
        %893 = vmatprep.subr.mxu0 0.0
        %894 = vmatpush1.msra.mxu0 0.0
        %895 = vmatprep.subr.mxu0 0.0
        %896 = vmatpush1.msra.mxu0 0.0
        %897 = vmatprep.subr.mxu0 0.0
        %898 = vmatpush1.msra.mxu0 0.0
        %899 = vmatprep.subr.mxu0 0.0
        %900 = vmatpush1.msra.mxu0 0.0
        %901 = vmatprep.subr.mxu0 0.0
        %902 = vmatpush1.msra.mxu0 0.0
        %903 = vmatprep.subr.mxu0 0.0
        %904 = vmatpush1.msra.mxu0 0.0
        %905 = vmatprep.subr.mxu0 0.0
        %906 = vmatpush1.msra.mxu0 0.0
        %907 = vmatprep.subr.mxu0 0.0
        %908 = vmatpush1.msra.mxu0 0.0
        %909 = vmatprep.subr.mxu0 0.0
        %910 = vmatpush1.msra.mxu0 0.0
        %911 = vmatprep.subr.mxu0 0.0
        %912 = vmatpush1.msra.mxu0 0.0
        %913 = vmatprep.subr.mxu0 0.0
        %914 = vmatpush1.msra.mxu0 0.0
        %915 = vmatprep.subr.mxu0 0.0
        %916 = vmatpush1.msra.mxu0 0.0
        %917 = vmatprep.subr.mxu0 0.0
        %918 = vmatpush1.msra.mxu0 0.0
        %919 = vmatprep.subr.mxu0 0.0
        %920 = vmatpush1.msra.mxu0 0.0
        %921 = vmatprep.subr.mxu0 0.0
        %922 = vmatpush1.msra.mxu0 0.0
        %923 = vmatprep.subr.mxu0 0.0
        %924 = vmatpush1.msra.mxu0 0.0
        %925 = vmatprep.subr.mxu0 0.0
        %926 = vmatpush1.msra.mxu0 0.0
        %927 = vmatprep.subr.mxu0 0.0
        %928 = vmatpush1.msra.mxu0 0.0
        %929 = vmatprep.subr.mxu0 0.0
        %930 = vmatpush1.msra.mxu0 0.0
        %931 = vmatprep.subr.mxu0 0.0
        %932 = vmatpush1.msra.mxu0 0.0
        %933 = vmatprep.subr.mxu0 0.0
        %934 = vmatpush1.msra.mxu0 0.0
        %935 = vmatprep.subr.mxu0 0.0
        %936 = vmatpush1.msra.mxu0 0.0
        %937 = vmatprep.subr.mxu0 0.0
        %938 = vmatpush1.msra.mxu0 0.0
        %939 = vmatprep.subr.mxu0 0.0
        %940 = vmatpush1.msra.mxu0 0.0
        %941 = vmatprep.mubr.f32.mxu0 0.0
        %942 = vmatmul.mubr.f32.gmra.mrb[0].mxu0 %v830
        %v943 = vpop.f32.mrb[0].mxu0
        %v944 = vadd.f32 %v826, %v943
        %v945 = vpop.f32.mrb[0].mxu0
        %946 = vmatprep.mubr.f32.mxu0 0.0
        %947 = vmatmul.mubr.f32.gmra.mrb[0].mxu0 %v833
        %v948 = vpop.f32.mrb[0].mxu0
        %v949 = vadd.f32 %v826, %v948
        %v950 = vpop.f32.mrb[0].mxu0
        %951 = vmatprep.mubr.f32.mxu0 0.0
        %952 = vmatmul.mubr.f32.gmra.mrb[0].mxu0 %v836
        %v953 = vpop.f32.mrb[0].mxu0
        %v954 = vadd.f32 %v826, %v953
        %v955 = vpop.f32.mrb[0].mxu0
        %956 = vmatprep.mubr.f32.mxu0 0.0
        %957 = vmatmul.mubr.f32.gmra.mrb[0].mxu0 %v839
        %v958 = vpop.f32.mrb[0].mxu0
        %v959 = vadd.f32 %v826, %v958
        %v960 = vpop.f32.mrb[0].mxu0
        %961 = vmatprep.mubr.f32.mxu0 0.0
        %962 = vmatmul.mubr.f32.gmra.mrb[0].mxu0 %v842
        %v963 = vpop.f32.mrb[0].mxu0
        %v964 = vadd.f32 %v826, %v963
        %v965 = vpop.f32.mrb[0].mxu0
        %966 = vmatprep.mubr.f32.mxu0 0.0
        %967 = vmatmul.mubr.f32.gmra.mrb[0].mxu0 %v845
        %v968 = vpop.f32.mrb[0].mxu0
        %v969 = vadd.f32 %v826, %v968
        %v970 = vpop.f32.mrb[0].mxu0
        %971 = vmatprep.mubr.f32.mxu0 0.0
        %972 = vmatmul.mubr.f32.gmra.mrb[0].mxu0 %v848
        %v973 = vpop.f32.mrb[0].mxu0
        %v974 = vadd.f32 %v826, %v973
        %v975 = vpop.f32.mrb[0].mxu0
        %976 = vmatprep.mubr.f32.mxu0 0.0
        %977 = vmatmul.mubr.f32.gmra.mrb[0].mxu0 %v851
        %v978 = vpop.f32.mrb[0].mxu0
        %v979 = vadd.f32 %v826, %v978
        %v980 = vpop.f32.mrb[0].mxu0
        %981 = vmatprep.mubr.f32.mxu0 0.0
        %982 = vmatmul.mubr.f32.gmra.mrb[0].mxu0 %v854
        %v983 = vpop.f32.mrb[0].mxu0
        %v984 = vadd.f32 %v826, %v983
        %v985 = vpop.f32.mrb[0].mxu0
        %986 = vmatprep.mubr.f32.mxu0 0.0
        %987 = vmatmul.mubr.f32.gmra.mrb[0].mxu0 %v857
        %v988 = vpop.f32.mrb[0].mxu0
        %v989 = vadd.f32 %v826, %v988
        %v990 = vpop.f32.mrb[0].mxu0
        %991 = vmatprep.mubr.f32.mxu0 0.0
        %992 = vmatmul.mubr.f32.gmra.mrb[0].mxu0 %v860
        %v993 = vpop.f32.mrb[0].mxu0
        %v994 = vadd.f32 %v826, %v993
        %v995 = vpop.f32.mrb[0].mxu0
        %996 = vmatprep.mubr.f32.mxu0 0.0
        %997 = vmatmul.mubr.f32.gmra.mrb[0].mxu0 %v863
        %v998 = vpop.f32.mrb[0].mxu0
        %v999 = vadd.f32 %v826, %v998
        %v1000 = vpop.f32.mrb[0].mxu0
        %1001 = vmatprep.mubr.f32.mxu0 0.0
        %1002 = vmatmul.mubr.f32.gmra.mrb[0].mxu0 %v866
        %v1003 = vpop.f32.mrb[0].mxu0
        %v1004 = vadd.f32 %v826, %v1003
        %v1005 = vpop.f32.mrb[0].mxu0
        %1006 = vmatprep.mubr.f32.mxu0 0.0
        %1007 = vmatmul.mubr.f32.gmra.mrb[0].mxu0 %v869
        %v1008 = vpop.f32.mrb[0].mxu0
        %v1009 = vadd.f32 %v826, %v1008
        %v1010 = vpop.f32.mrb[0].mxu0
        %1011 = vmatprep.mubr.f32.mxu0 0.0
        %1012 = vmatmul.mubr.f32.gmra.mrb[0].mxu0 %v872
        %v1013 = vpop.f32.mrb[0].mxu0
        %v1014 = vadd.f32 %v826, %v1013
        %v1015 = vpop.f32.mrb[0].mxu0
        %1016 = vmatprep.mubr.f32.mxu0 0.0
        %1017 = vmatmul.mubr.f32.gmra.mrb[0].mxu0 %v875
        %v1018 = vpop.f32.mrb[0].mxu0
        %v1019 = vadd.f32 %v826, %v1018
        %v1020 = vpop.f32.mrb[0].mxu0
        %1021 = vdwg.mxu0
        %v1022 = vlaneseq
        %v1023 = vshrl.u32 %v1022, 7
        %v1024 = vsub.s32 0, %v1023
        %v1025 = vrot.slane %v630, %v1024
        %v1026 = vadd.f32 %v944, %v1025
        %v1027 = vadd.f32 %v949, %v1025
        %v1028 = vadd.f32 %v954, %v1025
        %v1029 = vadd.f32 %v959, %v1025
        %v1030 = vadd.f32 %v964, %v1025
        %v1031 = vadd.f32 %v969, %v1025
        %v1032 = vadd.f32 %v974, %v1025
        %v1033 = vadd.f32 %v979, %v1025
        %v1034 = vadd.f32 %v984, %v1025
        %v1035 = vadd.f32 %v989, %v1025
        %v1036 = vadd.f32 %v994, %v1025
        %v1037 = vadd.f32 %v999, %v1025
        %v1038 = vadd.f32 %v1004, %v1025
        %v1039 = vadd.f32 %v1009, %v1025
        %v1040 = vadd.f32 %v1014, %v1025
        %v1041 = vadd.f32 %v1019, %v1025
        %v1042 = vxor.u32 %v1026, 2147483648
        %v1043 = vxor.u32 %v1027, 2147483648
        %v1044 = vxor.u32 %v1028, 2147483648
        %v1045 = vxor.u32 %v1029, 2147483648
        %v1046 = vxor.u32 %v1030, 2147483648
        %v1047 = vxor.u32 %v1031, 2147483648
        %v1048 = vxor.u32 %v1032, 2147483648
        %v1049 = vxor.u32 %v1033, 2147483648
        %v1050 = vxor.u32 %v1034, 2147483648
        %v1051 = vxor.u32 %v1035, 2147483648
        %v1052 = vxor.u32 %v1036, 2147483648
        %v1053 = vxor.u32 %v1037, 2147483648
        %v1054 = vxor.u32 %v1038, 2147483648
        %v1055 = vxor.u32 %v1039, 2147483648
        %v1056 = vxor.u32 %v1040, 2147483648
        %v1057 = vxor.u32 %v1041, 2147483648
        %v1058 = vmul.f32 %v1042, 1.442695
        %v1059 = vpow.pop %v1058
        %v1060 = vmul.f32 %v1043, 1.442695
        %v1061 = vpow.pop %v1060
        %v1062 = vmul.f32 %v1044, 1.442695
        %v1063 = vpow.pop %v1062
        %v1064 = vmul.f32 %v1045, 1.442695
        %v1065 = vpow.pop %v1064
        %v1066 = vmul.f32 %v1046, 1.442695
        %v1067 = vpow.pop %v1066
        %v1068 = vmul.f32 %v1047, 1.442695
        %v1069 = vpow.pop %v1068
        %v1070 = vmul.f32 %v1048, 1.442695
        %v1071 = vpow.pop %v1070
        %v1072 = vmul.f32 %v1049, 1.442695
        %v1073 = vpow.pop %v1072
        %v1074 = vmul.f32 %v1050, 1.442695
        %v1075 = vpow.pop %v1074
        %v1076 = vmul.f32 %v1051, 1.442695
        %v1077 = vpow.pop %v1076
        %v1078 = vmul.f32 %v1052, 1.442695
        %v1079 = vpow.pop %v1078
        %v1080 = vmul.f32 %v1053, 1.442695
        %v1081 = vpow.pop %v1080
        %v1082 = vmul.f32 %v1054, 1.442695
        %v1083 = vpow.pop %v1082
        %v1084 = vmul.f32 %v1055, 1.442695
        %v1085 = vpow.pop %v1084
        %v1086 = vmul.f32 %v1056, 1.442695
        %v1087 = vpow.pop %v1086
        %v1088 = vmul.f32 %v1057, 1.442695
        %v1089 = vpow.pop %v1088
        %v1090 = vadd.f32 %v1059, 1.0
        %v1091 = vadd.f32 %v1061, 1.0
        %v1092 = vadd.f32 %v1063, 1.0
        %v1093 = vadd.f32 %v1065, 1.0
        %v1094 = vadd.f32 %v1067, 1.0
        %v1095 = vadd.f32 %v1069, 1.0
        %v1096 = vadd.f32 %v1071, 1.0
        %v1097 = vadd.f32 %v1073, 1.0
        %v1098 = vadd.f32 %v1075, 1.0
        %v1099 = vadd.f32 %v1077, 1.0
        %v1100 = vadd.f32 %v1079, 1.0
        %v1101 = vadd.f32 %v1081, 1.0
        %v1102 = vadd.f32 %v1083, 1.0
        %v1103 = vadd.f32 %v1085, 1.0
        %v1104 = vadd.f32 %v1087, 1.0
        %v1105 = vadd.f32 %v1089, 1.0
        %v1106 = vrcp.pop %v1090
        %v1107 = vmul.f32 1.0, %v1106
        %v1108 = vrcp.pop %v1091
        %v1109 = vmul.f32 1.0, %v1108
        %v1110 = vrcp.pop %v1092
        %v1111 = vmul.f32 1.0, %v1110
        %v1112 = vrcp.pop %v1093
        %v1113 = vmul.f32 1.0, %v1112
        %v1114 = vrcp.pop %v1094
        %v1115 = vmul.f32 1.0, %v1114
        %v1116 = vrcp.pop %v1095
        %v1117 = vmul.f32 1.0, %v1116
        %v1118 = vrcp.pop %v1096
        %v1119 = vmul.f32 1.0, %v1118
        %v1120 = vrcp.pop %v1097
        %v1121 = vmul.f32 1.0, %v1120
        %v1122 = vrcp.pop %v1098
        %v1123 = vmul.f32 1.0, %v1122
        %v1124 = vrcp.pop %v1099
        %v1125 = vmul.f32 1.0, %v1124
        %v1126 = vrcp.pop %v1100
        %v1127 = vmul.f32 1.0, %v1126
        %v1128 = vrcp.pop %v1101
        %v1129 = vmul.f32 1.0, %v1128
        %v1130 = vrcp.pop %v1102
        %v1131 = vmul.f32 1.0, %v1130
        %v1132 = vrcp.pop %v1103
        %v1133 = vmul.f32 1.0, %v1132
        %v1134 = vrcp.pop %v1104
        %v1135 = vmul.f32 1.0, %v1134
        %v1136 = vrcp.pop %v1105
        %v1137 = vmul.f32 1.0, %v1136
        %v1138 = vmul.f32 %v398, 2.0
        %v1139 = vmul.f32 %v399, 2.0
        %v1140 = vmul.f32 %v400, 2.0
        %v1141 = vmul.f32 %v401, 2.0
        %v1142 = vmul.f32 %v402, 2.0
        %v1143 = vmul.f32 %v403, 2.0
        %v1144 = vmul.f32 %v404, 2.0
        %v1145 = vmul.f32 %v405, 2.0
        %v1146 = vmul.f32 %v406, 2.0
        %v1147 = vmul.f32 %v407, 2.0
        %v1148 = vmul.f32 %v408, 2.0
        %v1149 = vmul.f32 %v409, 2.0
        %v1150 = vmul.f32 %v410, 2.0
        %v1151 = vmul.f32 %v411, 2.0
        %v1152 = vmul.f32 %v412, 2.0
        %v1153 = vmul.f32 %v413, 2.0
        %v1154 = vmul.f32 %v1138, %v1107
        %v1155 = vmul.f32 %v1139, %v1109
        %v1156 = vmul.f32 %v1140, %v1111
        %v1157 = vmul.f32 %v1141, %v1113
        %v1158 = vmul.f32 %v1142, %v1115
        %v1159 = vmul.f32 %v1143, %v1117
        %v1160 = vmul.f32 %v1144, %v1119
        %v1161 = vmul.f32 %v1145, %v1121
        %v1162 = vmul.f32 %v1146, %v1123
        %v1163 = vmul.f32 %v1147, %v1125
        %v1164 = vmul.f32 %v1148, %v1127
        %v1165 = vmul.f32 %v1149, %v1129
        %v1166 = vmul.f32 %v1150, %v1131
        %v1167 = vmul.f32 %v1151, %v1133
        %v1168 = vmul.f32 %v1152, %v1135
        %v1169 = vmul.f32 %v1153, %v1137
        %v1170 = vmul.f32 %v414, 2.0
        %v1171 = vmul.f32 %v415, 2.0
        %v1172 = vmul.f32 %v416, 2.0
        %v1173 = vmul.f32 %v417, 2.0
        %v1174 = vmul.f32 %v418, 2.0
        %v1175 = vmul.f32 %v419, 2.0
        %v1176 = vmul.f32 %v420, 2.0
        %v1177 = vmul.f32 %v421, 2.0
        %v1178 = vmul.f32 %v422, 2.0
        %v1179 = vmul.f32 %v423, 2.0
        %v1180 = vmul.f32 %v424, 2.0
        %v1181 = vmul.f32 %v425, 2.0
        %v1182 = vmul.f32 %v426, 2.0
        %v1183 = vmul.f32 %v427, 2.0
        %v1184 = vmul.f32 %v428, 2.0
        %v1185 = vmul.f32 %v429, 2.0
        %v1186 = vsub.f32 1.0, %v1107
        %v1187 = vsub.f32 1.0, %v1109
        %v1188 = vsub.f32 1.0, %v1111
        %v1189 = vsub.f32 1.0, %v1113
        %v1190 = vsub.f32 1.0, %v1115
        %v1191 = vsub.f32 1.0, %v1117
        %v1192 = vsub.f32 1.0, %v1119
        %v1193 = vsub.f32 1.0, %v1121
        %v1194 = vsub.f32 1.0, %v1123
        %v1195 = vsub.f32 1.0, %v1125
        %v1196 = vsub.f32 1.0, %v1127
        %v1197 = vsub.f32 1.0, %v1129
        %v1198 = vsub.f32 1.0, %v1131
        %v1199 = vsub.f32 1.0, %v1133
        %v1200 = vsub.f32 1.0, %v1135
        %v1201 = vsub.f32 1.0, %v1137
        %v1202 = vmul.f32 %v1170, %v1186
        %v1203 = vmul.f32 %v1171, %v1187
        %v1204 = vmul.f32 %v1172, %v1188
        %v1205 = vmul.f32 %v1173, %v1189
        %v1206 = vmul.f32 %v1174, %v1190
        %v1207 = vmul.f32 %v1175, %v1191
        %v1208 = vmul.f32 %v1176, %v1192
        %v1209 = vmul.f32 %v1177, %v1193
        %v1210 = vmul.f32 %v1178, %v1194
        %v1211 = vmul.f32 %v1179, %v1195
        %v1212 = vmul.f32 %v1180, %v1196
        %v1213 = vmul.f32 %v1181, %v1197
        %v1214 = vmul.f32 %v1182, %v1198
        %v1215 = vmul.f32 %v1183, %v1199
        %v1216 = vmul.f32 %v1184, %v1200
        %v1217 = vmul.f32 %v1185, %v1201
        %v1218 = vadd.f32 %v1154, %v1202
        %v1219 = vadd.f32 %v1155, %v1203
        %v1220 = vadd.f32 %v1156, %v1204
        %v1221 = vadd.f32 %v1157, %v1205
        %v1222 = vadd.f32 %v1158, %v1206
        %v1223 = vadd.f32 %v1159, %v1207
        %v1224 = vadd.f32 %v1160, %v1208
        %v1225 = vadd.f32 %v1161, %v1209
        %v1226 = vadd.f32 %v1162, %v1210
        %v1227 = vadd.f32 %v1163, %v1211
        %v1228 = vadd.f32 %v1164, %v1212
        %v1229 = vadd.f32 %v1165, %v1213
        %v1230 = vadd.f32 %v1166, %v1214
        %v1231 = vadd.f32 %v1167, %v1215
        %v1232 = vadd.f32 %v1168, %v1216
        %v1233 = vadd.f32 %v1169, %v1217
        %1234 = vst [vmem:[%s392] sm:$0xff] %v1218
        %1235 = vst [vmem:[%s392 + $0x8] sm:$0xff] %v1219
        %1236 = vst [vmem:[%s392 + $0x10] sm:$0xff] %v1220
        %1237 = vst [vmem:[%s392 + $0x18] sm:$0xff] %v1221
        %1238 = vst [vmem:[%s392 + $0x20] sm:$0xff] %v1222
        %1239 = vst [vmem:[%s392 + $0x28] sm:$0xff] %v1223
        %1240 = vst [vmem:[%s392 + $0x30] sm:$0xff] %v1224
        %1241 = vst [vmem:[%s392 + $0x38] sm:$0xff] %v1225
        %1242 = vst [vmem:[%s392 + $0x40] sm:$0xff] %v1226
        %1243 = vst [vmem:[%s392 + $0x48] sm:$0xff] %v1227
        %1244 = vst [vmem:[%s392 + $0x50] sm:$0xff] %v1228
        %1245 = vst [vmem:[%s392 + $0x58] sm:$0xff] %v1229
        %1246 = vst [vmem:[%s392 + $0x60] sm:$0xff] %v1230
        %1247 = vst [vmem:[%s392 + $0x68] sm:$0xff] %v1231
        %1248 = vst [vmem:[%s392 + $0x70] sm:$0xff] %v1232
        %1249 = vst [vmem:[%s392 + $0x78] sm:$0xff] %v1233
        %s1250 = sand.u32 %s255, 1
        %s1251 = scalar_lea.sflag [#allocation4], %s1250
        %s1252 = sand.u32 %s255, 1
        %s1253 = smul.addr %s1252, 128
        %s1254 = scalar_lea.vmem [#allocation5], %s1253
        // Predicated region
        $region65: #{tpu_custom_call.1} parent=59 // pred_check
          %p1255 = pneg %p265
        $region66: #{tpu_custom_call.1} parent=59 // pred_check_branch
          %1257 = sbr.rel (%p1255) target = $region68
        $region67: #{tpu_custom_call.1} parent=59 // pred_region
          %s1259 = ssub.s32 2048, 2048
          %1260 = vsyncadd %s1251, %s1259
          %s1261 = smul.addr %s27, 16
          %s1262 = smul.addr %s1261, 128
          %s1263 = scalar_lea.hbm %s10, %s1262
          %s1264 = sshll.u32 %s1254, 4
          %s1265 = int_to_ptr.vmem [resolvable:$true] %s1264
          %1270 = dma.vmem_to_hbm [thread:$0]  %s1265, 2048, %s1263, %s1251, 128, 128, 8
        $region68: #{tpu_custom_call.1} parent=59 // pred_fallthru
          _
      $region60: #{tpu_custom_call.1} parent=5 // pred_fallthru
        _
      %p1271 = scmp.le.s32.totalorder 2, %s22
      // Predicated region
      $region69: #{tpu_custom_call.1} parent=5 // pred_check
        %p1272 = pneg %p1271
      $region70: #{tpu_custom_call.1} parent=5 // pred_check_branch
        %1274 = sbr.rel (%p1272) target = $region72
      $region71: #{tpu_custom_call.1} parent=5 // pred_region
        %s1275 = ssub.s32 %s22, 2
        // Predicated region
        $region73: #{tpu_custom_call.1} parent=71 // pred_check
          %p1276 = pneg %p271
        $region74: #{tpu_custom_call.1} parent=71 // pred_check_branch
          %1278 = sbr.rel (%p1276) target = $region76
        $region75: #{tpu_custom_call.1} parent=71 // pred_region
          %s1279 = sand.u32 %s256, 1
          %s1280 = scalar_lea.sflag [#allocation4], %s1279
          %s1281 = sand.u32 %s256, 1
          %s1282 = smul.addr %s1281, 128
          %s1283 = scalar_lea.vmem [#allocation5], %s1282
          %1284 = dma.done %s1280, 2048
        $region76: #{tpu_custom_call.1} parent=71 // pred_fallthru
          _
      $region72: #{tpu_custom_call.1} parent=5 // pred_fallthru
        _
    $region6: #{tpu_custom_call.1} parent=1 // loop_footer
      %s26 = sadd.s32 1, %s22
    $region7: #{tpu_custom_call.1} parent=1 // loop_footer_branch
      %21 = sbr.rel target = $region3
    $region8: #{tpu_custom_call.1} parent=1 // loop_exit
      _
    %1285 = vsyncpa [#allocation3], 1
    %s1286 = scalar_lea.sflag [#allocation3], 1
    %1287 = vsyncpa %s1286, 1
    %1288 = vsyncpa [#allocation4], 1
    %s1289 = scalar_lea.sflag [#allocation4], 1
    %1290 = vsyncpa %s1289, 1

</llo_original>
